<compile_context>
chip_gen: v5e
topology: v5e:2x2
jax: 0.10.0
libtpu: 0.0.40
codegen_flags: <defaults>
</compile_context>

<pallas_src>
import math
import functools

import jax
import jax.numpy as jnp
from jax.experimental import pallas as pl
from jax.experimental.pallas import tpu as pltpu

LN_EPS = 1e-5  # nn.LayerNorm default eps


# ----------------------------------------------------------------------------
# In-kernel helpers
# ----------------------------------------------------------------------------
def _erf(x):
    # Abramowitz & Stegun 7.1.26 rational approximation (max abs err ~1.5e-7),
    # reproduces PyTorch's exact erf-based GELU to f32 precision with ops that
    # lower cleanly in Mosaic.
    a1, a2, a3, a4, a5 = (0.254829592, -0.284496736, 1.421413741,
                          -1.453152027, 1.061405429)
    p = 0.3275911
    ax = jnp.abs(x)
    t = 1.0 / (1.0 + p * ax)
    poly = ((((a5 * t + a4) * t + a3) * t + a2) * t + a1) * t
    y = 1.0 - poly * jnp.exp(-ax * ax)
    return jnp.where(x >= 0, y, -y)


def _gelu_exact(x):
    return 0.5 * x * (1.0 + _erf(x * (1.0 / math.sqrt(2.0))))


def _layernorm(x, g, b):
    mu = jnp.mean(x, axis=-1, keepdims=True)
    xc = x - mu
    var = jnp.mean(xc * xc, axis=-1, keepdims=True)
    return xc * jax.lax.rsqrt(var + LN_EPS) * g + b


# ----------------------------------------------------------------------------
# Fused forward kernel: input projection + PE, all encoder layers, mean + head
# ----------------------------------------------------------------------------
def _fused_forward_kernel(num_heads,
                          x_ref, w_in_ref, pe_ref,
                          wqkv_ref, bqkv_ref, wo_ref,
                          w1_ref, b1_ref, w2_ref, vecs_ref,
                          w_out_ref, b_out_ref,
                          out_ref,
                          h_ref):
    layer = pl.program_id(1)
    n_layers = pl.num_programs(1)
    Bt, S, IN = x_ref.shape
    BS, D = h_ref.shape
    hd = D // num_heads

    # -------- stage 0 (first layer step): input projection + positional enc.
    @pl.when(layer == 0)
    def _():
        x2 = x_ref[...].reshape(BS, IN)
        y = jnp.dot(x2, w_in_ref[...], preferred_element_type=jnp.float32)
        # pe already contains the input-projection bias (host-side fold);
        # PE dropout = identity in eval mode.
        y = y.reshape(Bt, S, D) + pe_ref[...]
        h_ref[...] = y.reshape(BS, D)

    # -------- encoder layer `layer` (post-norm, GELU), whole batch tile at once
    x2 = h_ref[...]                                  # (BS, D)

    vecs = vecs_ref[0]                               # (6, D) packed vectors
    bo, ln1_g, ln1_b = vecs[0:1], vecs[1:2], vecs[2:3]
    b2, ln2_g, ln2_b = vecs[3:4], vecs[4:5], vecs[5:6]

    # fused QKV projection: one (BS, D) @ (D, 3D) MXU push.
    # 1/sqrt(hd) scale is pre-folded into the Q columns of wqkv/bqkv.
    qkv = jnp.dot(x2, wqkv_ref[0],
                  preferred_element_type=jnp.float32) + bqkv_ref[0]
    q = qkv[:, :D].reshape(Bt, S, D)
    k = qkv[:, D:2 * D].reshape(Bt, S, D)
    v = qkv[:, 2 * D:].reshape(Bt, S, D)

    # per-head attention, accumulated straight into the output projection
    # (no lane-axis concatenate of heads)
    attn = None
    for h in range(num_heads):                       # static, unrolled
        sl = slice(h * hd, (h + 1) * hd)
        s = jnp.einsum('bqd,bkd->bqk', q[..., sl], k[..., sl],
                       preferred_element_type=jnp.float32)
        s = s - jnp.max(s, axis=-1, keepdims=True)
        p = jnp.exp(s)
        p = p * pl.reciprocal(jnp.sum(p, axis=-1, keepdims=True), approx=True)
        oh = jnp.einsum('bqk,bkd->bqd', p, v[..., sl],
                        preferred_element_type=jnp.float32)   # (Bt, S, hd)
        contrib = jnp.dot(oh.reshape(BS, hd), wo_ref[0][sl, :],
                          preferred_element_type=jnp.float32)
        attn = contrib if attn is None else attn + contrib

    y1 = _layernorm(x2 + attn + bo, ln1_g, ln1_b)

    h1 = jnp.dot(y1, w1_ref[0], preferred_element_type=jnp.float32) + b1_ref[0]
    h1 = _gelu_exact(h1)
    ff = jnp.dot(h1, w2_ref[0], preferred_element_type=jnp.float32) + b2

    y2 = _layernorm(y1 + ff, ln2_g, ln2_b)
    h_ref[...] = y2

    # -------- final stage (last layer step): mean over seq + fc_out
    @pl.when(layer == n_layers - 1)
    def _():
        m = jnp.mean(y2.reshape(Bt, S, D), axis=1)   # (Bt, D); dropout = identity
        out_ref[...] = jnp.dot(m, w_out_ref[...],
                               preferred_element_type=jnp.float32) + b_out_ref[...]


# ----------------------------------------------------------------------------
# Wrapper
# ----------------------------------------------------------------------------
def _pick_batch_tile(B, S, target_rows=1024):
    """Largest divisor Bt of B with Bt*S <= target_rows that keeps the (Bt, 1)
    output block legal (Bt == B or Bt a multiple of 8). Bigger tiles amortize
    the per-layer weight stream over more matmul rows."""
    max_bt = max(1, target_rows // max(1, S))
    best = None
    for cand in range(1, B + 1):
        if B % cand == 0 and (cand == B or cand % 8 == 0) and cand <= max_bt:
            best = cand
    if best is not None:
        return best
    for cand in range(1, B + 1):                     # smallest legal divisor
        if B % cand == 0 and (cand == B or cand % 8 == 0):
            return cand
    return B


def prepare_params(params, num_heads):
    """One-time host-side folds (no per-call kernel cost):
       * 1/sqrt(head_dim) attention scale into the Q slice of W_qkv / b_qkv,
       * input-projection bias into the positional-encoding table."""
    D = params["w_in"].shape[1]
    hd = D // num_heads
    scale = 1.0 / math.sqrt(hd)
    p = dict(params)
    p["wqkv"] = params["wqkv"].at[:, :, :D].multiply(scale)
    p["bqkv"] = params["bqkv"].at[:, :, :D].multiply(scale)
    p["pe"] = params["pe"] + params["b_in"]
    return p


def transformer_forward(x, params, num_heads):
    """params must have been passed through prepare_params() once."""
    B, S, IN = x.shape
    D = params["w_in"].shape[1]
    F = params["w1"].shape[2]
    L = params["wqkv"].shape[0]

    Bt = _pick_batch_tile(B, S)
    nb = B // Bt

    const2 = lambda b, l: (0, 0)        # noqa: E731  (replicated 2-D params)
    per_layer = lambda b, l: (l, 0, 0)  # noqa: E731  (stacked per-layer params)

    out = pl.pallas_call(
        functools.partial(_fused_forward_kernel, num_heads),
        out_shape=jax.ShapeDtypeStruct((B, 1), jnp.float32),
        grid=(nb, L),
        in_specs=[
            pl.BlockSpec((Bt, S, IN), lambda b, l: (b, 0, 0)),   # x
            pl.BlockSpec((IN, D), const2),                       # w_in
            pl.BlockSpec((S, D), const2),                        # pe (+ b_in folded)
            pl.BlockSpec((1, D, 3 * D), per_layer),              # wqkv (Q pre-scaled)
            pl.BlockSpec((1, 1, 3 * D), per_layer),              # bqkv
            pl.BlockSpec((1, D, D), per_layer),                  # wo
            pl.BlockSpec((1, D, F), per_layer),                  # w1
            pl.BlockSpec((1, 1, F), per_layer),                  # b1
            pl.BlockSpec((1, F, D), per_layer),                  # w2
            pl.BlockSpec((1, 6, D), per_layer),                  # packed vecs
            pl.BlockSpec((D, 1), const2),                        # w_out
            pl.BlockSpec((1, 1), const2),                        # b_out
        ],
        out_specs=pl.BlockSpec((Bt, 1), lambda b, l: (b, 0)),
        scratch_shapes=[pltpu.VMEM((Bt * S, D), jnp.float32)],
        compiler_params=pltpu.CompilerParams(
            dimension_semantics=("parallel", "arbitrary"),
            vmem_limit_bytes=48 * 1024 * 1024),
    )(x, params["w_in"], params["pe"],
      params["wqkv"], params["bqkv"], params["wo"],
      params["w1"], params["b1"], params["w2"], params["vecs"],
      params["w_out"], params["b_out"])
    return out[:, 0]                                 # .squeeze(1) -> (B,)


# ----------------------------------------------------------------------------
# Deterministic parameter construction (shapes from TransformerModel.__init__)
# ----------------------------------------------------------------------------
def _make_pe(max_len, d_model):
    pos = jnp.arange(max_len, dtype=jnp.float32)[:, None]
    div = jnp.exp(jnp.arange(0, d_model, 2, dtype=jnp.float32)
                  * (-math.log(10000.0) / d_model))
    pe = jnp.zeros((max_len, d_model), jnp.float32)
    pe = pe.at[:, 0::2].set(jnp.sin(pos * div))
    pe = pe.at[:, 1::2].set(jnp.cos(pos * div))
    return pe


def init_params(key, input_dim, model_dim, num_heads, num_layers, window_size):
    D = model_dim
    F = 4 * D
    L = num_layers
    keys = iter(jax.random.split(key, 2 + 3 * L))

    def xavier(k, fan_in, fan_out, shape):
        bound = math.sqrt(6.0 / (fan_in + fan_out))
        return jax.random.uniform(k, shape, jnp.float32, -bound, bound)

    wqkv, wo, w1, w2 = [], [], [], []
    for _ in range(L):
        wqkv.append(xavier(next(keys), D, 3 * D, (D, 3 * D)))
        wo.append(xavier(next(keys), D, D, (D, D)))
        kf1, kf2 = jax.random.split(next(keys))
        w1.append(xavier(kf1, D, F, (D, F)))
        w2.append(xavier(kf2, F, D, (F, D)))

    # packed (1, D) vectors per layer: [bo, ln1_g, ln1_b, b2, ln2_g, ln2_b]
    vec_row = jnp.stack([jnp.zeros(D), jnp.ones(D), jnp.zeros(D),
                         jnp.zeros(D), jnp.ones(D), jnp.zeros(D)]).astype(jnp.float32)

    return {
        "w_in": xavier(next(keys), input_dim, D, (input_dim, D)),
        "b_in": jnp.zeros((1, D), jnp.float32),
        "pe": _make_pe(window_size, D),
        "wqkv": jnp.stack(wqkv),
        "bqkv": jnp.zeros((L, 1, 3 * D), jnp.float32),
        "wo": jnp.stack(wo),
        "w1": jnp.stack(w1),
        "b1": jnp.zeros((L, 1, F), jnp.float32),
        "w2": jnp.stack(w2),
        "vecs": jnp.tile(vec_row[None], (L, 1, 1)),
        "w_out": xavier(next(keys), D, 1, (D, 1)),
        "b_out": jnp.zeros((1, 1), jnp.float32),
    }


# ----------------------------------------------------------------------------
if __name__ == "__main__":
    BATCH = 2
    WINDOW = 8          # window_size == seq_len == PE max_len
    INPUT_DIM = 4
    MODEL_DIM = 32
    NUM_HEADS = 4
    NUM_LAYERS = 2

    key = jax.random.PRNGKey(0)
    k_x, k_p = jax.random.split(key)
    x = jax.random.normal(k_x, (BATCH, WINDOW, INPUT_DIM), jnp.float32)
    params = prepare_params(
        init_params(k_p, INPUT_DIM, MODEL_DIM, NUM_HEADS, NUM_LAYERS, WINDOW),
        NUM_HEADS)

    out = transformer_forward(x, params, NUM_HEADS)
    out = jax.block_until_ready(out)
    assert out.shape == (BATCH,) and out.dtype == jnp.float32
    print("KERNEL_OK")
</pallas_src>

<mosaic_0001>
module attributes {stable_mosaic.version = 11 : i64} {
  func.func @_fused_forward_kernel(%arg0: i32, %arg1: i32, %arg2: memref<2x8x4xf32, #tpu.memory_space<vmem>>, %arg3: memref<4x32xf32, #tpu.memory_space<vmem>>, %arg4: memref<8x32xf32, #tpu.memory_space<vmem>>, %arg5: memref<1x32x96xf32, #tpu.memory_space<vmem>>, %arg6: memref<1x1x96xf32, #tpu.memory_space<vmem>>, %arg7: memref<1x32x32xf32, #tpu.memory_space<vmem>>, %arg8: memref<1x32x128xf32, #tpu.memory_space<vmem>>, %arg9: memref<1x1x128xf32, #tpu.memory_space<vmem>>, %arg10: memref<1x128x32xf32, #tpu.memory_space<vmem>>, %arg11: memref<1x6x32xf32, #tpu.memory_space<vmem>>, %arg12: memref<32x1xf32, #tpu.memory_space<vmem>>, %arg13: memref<1x1xf32, #tpu.memory_space<vmem>>, %arg14: memref<2x1xf32, #tpu.memory_space<vmem>>, %arg15: memref<16x32xf32, #tpu.memory_space<vmem>>) attributes {dimension_semantics = [#tpu.dimension_semantics<parallel>, #tpu.dimension_semantics<arbitrary>], iteration_bounds = array<i64: 1, 2>, scalar_prefetch = 0 : i64, scratch_operands = 1 : i64, tpu.core_type = #tpu.core_type<tc>, window_params = [{transform_indices = @transform_0, window_bounds = array<i64: 2, 8, 4>}, {pipeline_mode = #tpu.pipeline_mode<synchronous>, transform_indices = @transform_1, window_bounds = array<i64: 4, 32>}, {pipeline_mode = #tpu.pipeline_mode<synchronous>, transform_indices = @transform_2, window_bounds = array<i64: 8, 32>}, {transform_indices = @transform_3, window_bounds = array<i64: 1, 32, 96>}, {transform_indices = @transform_4, window_bounds = array<i64: 1, 1, 96>}, {transform_indices = @transform_5, window_bounds = array<i64: 1, 32, 32>}, {transform_indices = @transform_6, window_bounds = array<i64: 1, 32, 128>}, {transform_indices = @transform_7, window_bounds = array<i64: 1, 1, 128>}, {transform_indices = @transform_8, window_bounds = array<i64: 1, 128, 32>}, {transform_indices = @transform_9, window_bounds = array<i64: 1, 6, 32>}, {pipeline_mode = #tpu.pipeline_mode<synchronous>, transform_indices = @transform_10, window_bounds = array<i64: 32, 1>}, {pipeline_mode = #tpu.pipeline_mode<synchronous>, transform_indices = @transform_11, window_bounds = array<i64: 1, 1>}, {transform_indices = @transform_12, window_bounds = array<i64: 2, 1>}]} {
    %c0_i32 = arith.constant 0 : i32
    %0 = arith.cmpi eq, %arg1, %c0_i32 : i32
    %1 = arith.extui %0 : i1 to i32
    %c0_i32_0 = arith.constant 0 : i32
    %2 = arith.cmpi ne, %1, %c0_i32_0 : i32
    scf.if %2 {
      %c0_82 = arith.constant 0 : index
      %c0_83 = arith.constant 0 : index
      %c0_84 = arith.constant 0 : index
      %208 = vector.load %arg2[%c0_82, %c0_83, %c0_84] : memref<2x8x4xf32, #tpu.memory_space<vmem>>, vector<2x8x4xf32>
      %209 = vector.shape_cast %208 : vector<2x8x4xf32> to vector<16x4xf32>
      %c0_85 = arith.constant 0 : index
      %c0_86 = arith.constant 0 : index
      %210 = vector.load %arg3[%c0_85, %c0_86] : memref<4x32xf32, #tpu.memory_space<vmem>>, vector<4x32xf32>
      %cst_87 = arith.constant dense<0.000000e+00> : vector<16x32xf32>
      %211 = tpu.matmul %209, %210, %cst_87 {dimension_numbers = #tpu.dot_dimension_numbers<[1], [0], [0], [1], [0, 0, 1, 1], [], []>} : vector<16x4xf32>, vector<4x32xf32>, vector<16x32xf32> -> vector<16x32xf32>
      %212 = vector.shape_cast %211 : vector<16x32xf32> to vector<2x8x32xf32>
      %c0_88 = arith.constant 0 : index
      %c0_89 = arith.constant 0 : index
      %213 = vector.load %arg4[%c0_88, %c0_89] : memref<8x32xf32, #tpu.memory_space<vmem>>, vector<8x32xf32>
      %214 = vector.shape_cast %213 : vector<8x32xf32> to vector<1x8x32xf32>
      %215 = vector.broadcast %214 : vector<1x8x32xf32> to vector<2x8x32xf32>
      %216 = arith.addf %212, %215 : vector<2x8x32xf32>
      %217 = vector.shape_cast %216 : vector<2x8x32xf32> to vector<16x32xf32>
      %c0_90 = arith.constant 0 : index
      %c0_91 = arith.constant 0 : index
      %218 = vector.load %arg15[%c0_90, %c0_91] : memref<16x32xf32, #tpu.memory_space<vmem>>, vector<16x32xf32>
      tpu.vector_store %arg15[%c0_90, %c0_91], %217 {strides = array<i32>} : memref<16x32xf32, #tpu.memory_space<vmem>>, vector<16x32xf32>,
    } else {
    }
    %c0 = arith.constant 0 : index
    %c0_1 = arith.constant 0 : index
    %3 = vector.load %arg15[%c0, %c0_1] : memref<16x32xf32, #tpu.memory_space<vmem>>, vector<16x32xf32>
    %c0_2 = arith.constant 0 : index
    %c0_3 = arith.constant 0 : index
    %c0_4 = arith.constant 0 : index
    %4 = vector.load %arg11[%c0_2, %c0_3, %c0_4] : memref<1x6x32xf32, #tpu.memory_space<vmem>>, vector<1x6x32xf32>
    %5 = vector.shape_cast %4 : vector<1x6x32xf32> to vector<6x32xf32>
    %6 = vector.extract_strided_slice %5 {offsets = [0, 0], sizes = [1, 32], strides = [1, 1]} : vector<6x32xf32> to vector<1x32xf32>
    %7 = vector.extract_strided_slice %5 {offsets = [1, 0], sizes = [1, 32], strides = [1, 1]} : vector<6x32xf32> to vector<1x32xf32>
    %8 = vector.extract_strided_slice %5 {offsets = [2, 0], sizes = [1, 32], strides = [1, 1]} : vector<6x32xf32> to vector<1x32xf32>
    %9 = vector.extract_strided_slice %5 {offsets = [3, 0], sizes = [1, 32], strides = [1, 1]} : vector<6x32xf32> to vector<1x32xf32>
    %10 = vector.extract_strided_slice %5 {offsets = [4, 0], sizes = [1, 32], strides = [1, 1]} : vector<6x32xf32> to vector<1x32xf32>
    %11 = vector.extract_strided_slice %5 {offsets = [5, 0], sizes = [1, 32], strides = [1, 1]} : vector<6x32xf32> to vector<1x32xf32>
    %c0_5 = arith.constant 0 : index
    %c0_6 = arith.constant 0 : index
    %c0_7 = arith.constant 0 : index
    %12 = vector.load %arg5[%c0_5, %c0_6, %c0_7] : memref<1x32x96xf32, #tpu.memory_space<vmem>>, vector<1x32x96xf32>
    %13 = vector.shape_cast %12 : vector<1x32x96xf32> to vector<32x96xf32>
    %cst = arith.constant dense<0.000000e+00> : vector<16x96xf32>
    %14 = tpu.matmul %3, %13, %cst {dimension_numbers = #tpu.dot_dimension_numbers<[1], [0], [0], [1], [0, 0, 1, 1], [], []>} : vector<16x32xf32>, vector<32x96xf32>, vector<16x96xf32> -> vector<16x96xf32>
    %c0_8 = arith.constant 0 : index
    %c0_9 = arith.constant 0 : index
    %c0_10 = arith.constant 0 : index
    %15 = vector.load %arg6[%c0_8, %c0_9, %c0_10] : memref<1x1x96xf32, #tpu.memory_space<vmem>>, vector<1x1x96xf32>
    %16 = vector.shape_cast %15 : vector<1x1x96xf32> to vector<1x96xf32>
    %17 = vector.broadcast %16 : vector<1x96xf32> to vector<16x96xf32>
    %18 = arith.addf %14, %17 : vector<16x96xf32>
    %19 = vector.extract_strided_slice %18 {offsets = [0, 0], sizes = [16, 32], strides = [1, 1]} : vector<16x96xf32> to vector<16x32xf32>
    %20 = vector.shape_cast %19 : vector<16x32xf32> to vector<2x8x32xf32>
    %21 = vector.extract_strided_slice %18 {offsets = [0, 32], sizes = [16, 32], strides = [1, 1]} : vector<16x96xf32> to vector<16x32xf32>
    %22 = vector.shape_cast %21 : vector<16x32xf32> to vector<2x8x32xf32>
    %23 = vector.extract_strided_slice %18 {offsets = [0, 64], sizes = [16, 32], strides = [1, 1]} : vector<16x96xf32> to vector<16x32xf32>
    %24 = vector.shape_cast %23 : vector<16x32xf32> to vector<2x8x32xf32>
    %25 = vector.extract_strided_slice %20 {offsets = [0, 0, 0], sizes = [2, 8, 8], strides = [1, 1, 1]} : vector<2x8x32xf32> to vector<2x8x8xf32>
    %26 = vector.extract_strided_slice %22 {offsets = [0, 0, 0], sizes = [2, 8, 8], strides = [1, 1, 1]} : vector<2x8x32xf32> to vector<2x8x8xf32>
    "tpu.trace_start"() <{level = 10 : i32, message = "bqd,bkd->bqk"}> : () -> ()
    %cst_11 = arith.constant dense<0.000000e+00> : vector<2x8x8xf32>
    %27 = tpu.matmul %25, %26, %cst_11 {dimension_numbers = #tpu.dot_dimension_numbers<[2], [2], [1], [1], [0, 0, 0, 1, 1, 1], [0], [0]>} : vector<2x8x8xf32>, vector<2x8x8xf32>, vector<2x8x8xf32> -> vector<2x8x8xf32>
    "tpu.trace_stop"() : () -> ()
    %cst_12 = arith.constant dense<0xFF800000> : vector<2x8xf32>
    %28 = vector.multi_reduction <maximumf>, %27, %cst_12 [2] : vector<2x8x8xf32> to vector<2x8xf32>
    %29 = vector.shape_cast %28 : vector<2x8xf32> to vector<2x8x1xf32>
    %30 = vector.broadcast %29 : vector<2x8x1xf32> to vector<2x8x8xf32>
    %31 = arith.subf %27, %30 : vector<2x8x8xf32>
    %32 = math.exp %31 : vector<2x8x8xf32>
    %cst_13 = arith.constant dense<0.000000e+00> : vector<2x8xf32>
    %33 = vector.multi_reduction <add>, %32, %cst_13 [2] : vector<2x8x8xf32> to vector<2x8xf32>
    %34 = vector.shape_cast %33 : vector<2x8xf32> to vector<2x8x1xf32>
    %35 = tpu.reciprocal %34 {approx = true} : vector<2x8x1xf32> -> vector<2x8x1xf32>
    %36 = vector.broadcast %35 : vector<2x8x1xf32> to vector<2x8x8xf32>
    %37 = arith.mulf %32, %36 : vector<2x8x8xf32>
    %38 = vector.extract_strided_slice %24 {offsets = [0, 0, 0], sizes = [2, 8, 8], strides = [1, 1, 1]} : vector<2x8x32xf32> to vector<2x8x8xf32>
    "tpu.trace_start"() <{level = 10 : i32, message = "bqk,bkd->bqd"}> : () -> ()
    %cst_14 = arith.constant dense<0.000000e+00> : vector<2x8x8xf32>
    %39 = tpu.matmul %37, %38, %cst_14 {dimension_numbers = #tpu.dot_dimension_numbers<[2], [1], [1], [2], [0, 0, 0, 1, 1, 2], [0], [0]>} : vector<2x8x8xf32>, vector<2x8x8xf32>, vector<2x8x8xf32> -> vector<2x8x8xf32>
    "tpu.trace_stop"() : () -> ()
    %40 = vector.shape_cast %39 : vector<2x8x8xf32> to vector<16x8xf32>
    %c0_15 = arith.constant 0 : index
    %c0_16 = arith.constant 0 : index
    %c0_17 = arith.constant 0 : index
    %41 = vector.load %arg7[%c0_15, %c0_16, %c0_17] : memref<1x32x32xf32, #tpu.memory_space<vmem>>, vector<1x32x32xf32>
    %42 = vector.shape_cast %41 : vector<1x32x32xf32> to vector<32x32xf32>
    %43 = vector.extract_strided_slice %42 {offsets = [0, 0], sizes = [8, 32], strides = [1, 1]} : vector<32x32xf32> to vector<8x32xf32>
    %cst_18 = arith.constant dense<0.000000e+00> : vector<16x32xf32>
    %44 = tpu.matmul %40, %43, %cst_18 {dimension_numbers = #tpu.dot_dimension_numbers<[1], [0], [0], [1], [0, 0, 1, 1], [], []>} : vector<16x8xf32>, vector<8x32xf32>, vector<16x32xf32> -> vector<16x32xf32>
    %45 = vector.extract_strided_slice %20 {offsets = [0, 0, 8], sizes = [2, 8, 8], strides = [1, 1, 1]} : vector<2x8x32xf32> to vector<2x8x8xf32>
    %46 = vector.extract_strided_slice %22 {offsets = [0, 0, 8], sizes = [2, 8, 8], strides = [1, 1, 1]} : vector<2x8x32xf32> to vector<2x8x8xf32>
    "tpu.trace_start"() <{level = 10 : i32, message = "bqd,bkd->bqk"}> : () -> ()
    %cst_19 = arith.constant dense<0.000000e+00> : vector<2x8x8xf32>
    %47 = tpu.matmul %45, %46, %cst_19 {dimension_numbers = #tpu.dot_dimension_numbers<[2], [2], [1], [1], [0, 0, 0, 1, 1, 1], [0], [0]>} : vector<2x8x8xf32>, vector<2x8x8xf32>, vector<2x8x8xf32> -> vector<2x8x8xf32>
    "tpu.trace_stop"() : () -> ()
    %cst_20 = arith.constant dense<0xFF800000> : vector<2x8xf32>
    %48 = vector.multi_reduction <maximumf>, %47, %cst_20 [2] : vector<2x8x8xf32> to vector<2x8xf32>
    %49 = vector.shape_cast %48 : vector<2x8xf32> to vector<2x8x1xf32>
    %50 = vector.broadcast %49 : vector<2x8x1xf32> to vector<2x8x8xf32>
    %51 = arith.subf %47, %50 : vector<2x8x8xf32>
    %52 = math.exp %51 : vector<2x8x8xf32>
    %cst_21 = arith.constant dense<0.000000e+00> : vector<2x8xf32>
    %53 = vector.multi_reduction <add>, %52, %cst_21 [2] : vector<2x8x8xf32> to vector<2x8xf32>
    %54 = vector.shape_cast %53 : vector<2x8xf32> to vector<2x8x1xf32>
    %55 = tpu.reciprocal %54 {approx = true} : vector<2x8x1xf32> -> vector<2x8x1xf32>
    %56 = vector.broadcast %55 : vector<2x8x1xf32> to vector<2x8x8xf32>
    %57 = arith.mulf %52, %56 : vector<2x8x8xf32>
    %58 = vector.extract_strided_slice %24 {offsets = [0, 0, 8], sizes = [2, 8, 8], strides = [1, 1, 1]} : vector<2x8x32xf32> to vector<2x8x8xf32>
    "tpu.trace_start"() <{level = 10 : i32, message = "bqk,bkd->bqd"}> : () -> ()
    %cst_22 = arith.constant dense<0.000000e+00> : vector<2x8x8xf32>
    %59 = tpu.matmul %57, %58, %cst_22 {dimension_numbers = #tpu.dot_dimension_numbers<[2], [1], [1], [2], [0, 0, 0, 1, 1, 2], [0], [0]>} : vector<2x8x8xf32>, vector<2x8x8xf32>, vector<2x8x8xf32> -> vector<2x8x8xf32>
    "tpu.trace_stop"() : () -> ()
    %60 = vector.shape_cast %59 : vector<2x8x8xf32> to vector<16x8xf32>
    %c0_23 = arith.constant 0 : index
    %c0_24 = arith.constant 0 : index
    %c0_25 = arith.constant 0 : index
    %61 = vector.load %arg7[%c0_23, %c0_24, %c0_25] : memref<1x32x32xf32, #tpu.memory_space<vmem>>, vector<1x32x32xf32>
    %62 = vector.shape_cast %61 : vector<1x32x32xf32> to vector<32x32xf32>
    %63 = vector.extract_strided_slice %62 {offsets = [8, 0], sizes = [8, 32], strides = [1, 1]} : vector<32x32xf32> to vector<8x32xf32>
    %cst_26 = arith.constant dense<0.000000e+00> : vector<16x32xf32>
    %64 = tpu.matmul %60, %63, %cst_26 {dimension_numbers = #tpu.dot_dimension_numbers<[1], [0], [0], [1], [0, 0, 1, 1], [], []>} : vector<16x8xf32>, vector<8x32xf32>, vector<16x32xf32> -> vector<16x32xf32>
    %65 = arith.addf %44, %64 : vector<16x32xf32>
    %66 = vector.extract_strided_slice %20 {offsets = [0, 0, 16], sizes = [2, 8, 8], strides = [1, 1, 1]} : vector<2x8x32xf32> to vector<2x8x8xf32>
    %67 = vector.extract_strided_slice %22 {offsets = [0, 0, 16], sizes = [2, 8, 8], strides = [1, 1, 1]} : vector<2x8x32xf32> to vector<2x8x8xf32>
    "tpu.trace_start"() <{level = 10 : i32, message = "bqd,bkd->bqk"}> : () -> ()
    %cst_27 = arith.constant dense<0.000000e+00> : vector<2x8x8xf32>
    %68 = tpu.matmul %66, %67, %cst_27 {dimension_numbers = #tpu.dot_dimension_numbers<[2], [2], [1], [1], [0, 0, 0, 1, 1, 1], [0], [0]>} : vector<2x8x8xf32>, vector<2x8x8xf32>, vector<2x8x8xf32> -> vector<2x8x8xf32>
    "tpu.trace_stop"() : () -> ()
    %cst_28 = arith.constant dense<0xFF800000> : vector<2x8xf32>
    %69 = vector.multi_reduction <maximumf>, %68, %cst_28 [2] : vector<2x8x8xf32> to vector<2x8xf32>
    %70 = vector.shape_cast %69 : vector<2x8xf32> to vector<2x8x1xf32>
    %71 = vector.broadcast %70 : vector<2x8x1xf32> to vector<2x8x8xf32>
    %72 = arith.subf %68, %71 : vector<2x8x8xf32>
    %73 = math.exp %72 : vector<2x8x8xf32>
    %cst_29 = arith.constant dense<0.000000e+00> : vector<2x8xf32>
    %74 = vector.multi_reduction <add>, %73, %cst_29 [2] : vector<2x8x8xf32> to vector<2x8xf32>
    %75 = vector.shape_cast %74 : vector<2x8xf32> to vector<2x8x1xf32>
    %76 = tpu.reciprocal %75 {approx = true} : vector<2x8x1xf32> -> vector<2x8x1xf32>
    %77 = vector.broadcast %76 : vector<2x8x1xf32> to vector<2x8x8xf32>
    %78 = arith.mulf %73, %77 : vector<2x8x8xf32>
    %79 = vector.extract_strided_slice %24 {offsets = [0, 0, 16], sizes = [2, 8, 8], strides = [1, 1, 1]} : vector<2x8x32xf32> to vector<2x8x8xf32>
    "tpu.trace_start"() <{level = 10 : i32, message = "bqk,bkd->bqd"}> : () -> ()
    %cst_30 = arith.constant dense<0.000000e+00> : vector<2x8x8xf32>
    %80 = tpu.matmul %78, %79, %cst_30 {dimension_numbers = #tpu.dot_dimension_numbers<[2], [1], [1], [2], [0, 0, 0, 1, 1, 2], [0], [0]>} : vector<2x8x8xf32>, vector<2x8x8xf32>, vector<2x8x8xf32> -> vector<2x8x8xf32>
    "tpu.trace_stop"() : () -> ()
    %81 = vector.shape_cast %80 : vector<2x8x8xf32> to vector<16x8xf32>
    %c0_31 = arith.constant 0 : index
    %c0_32 = arith.constant 0 : index
    %c0_33 = arith.constant 0 : index
    %82 = vector.load %arg7[%c0_31, %c0_32, %c0_33] : memref<1x32x32xf32, #tpu.memory_space<vmem>>, vector<1x32x32xf32>
    %83 = vector.shape_cast %82 : vector<1x32x32xf32> to vector<32x32xf32>
    %84 = vector.extract_strided_slice %83 {offsets = [16, 0], sizes = [8, 32], strides = [1, 1]} : vector<32x32xf32> to vector<8x32xf32>
    %cst_34 = arith.constant dense<0.000000e+00> : vector<16x32xf32>
    %85 = tpu.matmul %81, %84, %cst_34 {dimension_numbers = #tpu.dot_dimension_numbers<[1], [0], [0], [1], [0, 0, 1, 1], [], []>} : vector<16x8xf32>, vector<8x32xf32>, vector<16x32xf32> -> vector<16x32xf32>
    %86 = arith.addf %65, %85 : vector<16x32xf32>
    %87 = vector.extract_strided_slice %20 {offsets = [0, 0, 24], sizes = [2, 8, 8], strides = [1, 1, 1]} : vector<2x8x32xf32> to vector<2x8x8xf32>
    %88 = vector.extract_strided_slice %22 {offsets = [0, 0, 24], sizes = [2, 8, 8], strides = [1, 1, 1]} : vector<2x8x32xf32> to vector<2x8x8xf32>
    "tpu.trace_start"() <{level = 10 : i32, message = "bqd,bkd->bqk"}> : () -> ()
    %cst_35 = arith.constant dense<0.000000e+00> : vector<2x8x8xf32>
    %89 = tpu.matmul %87, %88, %cst_35 {dimension_numbers = #tpu.dot_dimension_numbers<[2], [2], [1], [1], [0, 0, 0, 1, 1, 1], [0], [0]>} : vector<2x8x8xf32>, vector<2x8x8xf32>, vector<2x8x8xf32> -> vector<2x8x8xf32>
    "tpu.trace_stop"() : () -> ()
    %cst_36 = arith.constant dense<0xFF800000> : vector<2x8xf32>
    %90 = vector.multi_reduction <maximumf>, %89, %cst_36 [2] : vector<2x8x8xf32> to vector<2x8xf32>
    %91 = vector.shape_cast %90 : vector<2x8xf32> to vector<2x8x1xf32>
    %92 = vector.broadcast %91 : vector<2x8x1xf32> to vector<2x8x8xf32>
    %93 = arith.subf %89, %92 : vector<2x8x8xf32>
    %94 = math.exp %93 : vector<2x8x8xf32>
    %cst_37 = arith.constant dense<0.000000e+00> : vector<2x8xf32>
    %95 = vector.multi_reduction <add>, %94, %cst_37 [2] : vector<2x8x8xf32> to vector<2x8xf32>
    %96 = vector.shape_cast %95 : vector<2x8xf32> to vector<2x8x1xf32>
    %97 = tpu.reciprocal %96 {approx = true} : vector<2x8x1xf32> -> vector<2x8x1xf32>
    %98 = vector.broadcast %97 : vector<2x8x1xf32> to vector<2x8x8xf32>
    %99 = arith.mulf %94, %98 : vector<2x8x8xf32>
    %100 = vector.extract_strided_slice %24 {offsets = [0, 0, 24], sizes = [2, 8, 8], strides = [1, 1, 1]} : vector<2x8x32xf32> to vector<2x8x8xf32>
    "tpu.trace_start"() <{level = 10 : i32, message = "bqk,bkd->bqd"}> : () -> ()
    %cst_38 = arith.constant dense<0.000000e+00> : vector<2x8x8xf32>
    %101 = tpu.matmul %99, %100, %cst_38 {dimension_numbers = #tpu.dot_dimension_numbers<[2], [1], [1], [2], [0, 0, 0, 1, 1, 2], [0], [0]>} : vector<2x8x8xf32>, vector<2x8x8xf32>, vector<2x8x8xf32> -> vector<2x8x8xf32>
    "tpu.trace_stop"() : () -> ()
    %102 = vector.shape_cast %101 : vector<2x8x8xf32> to vector<16x8xf32>
    %c0_39 = arith.constant 0 : index
    %c0_40 = arith.constant 0 : index
    %c0_41 = arith.constant 0 : index
    %103 = vector.load %arg7[%c0_39, %c0_40, %c0_41] : memref<1x32x32xf32, #tpu.memory_space<vmem>>, vector<1x32x32xf32>
    %104 = vector.shape_cast %103 : vector<1x32x32xf32> to vector<32x32xf32>
    %105 = vector.extract_strided_slice %104 {offsets = [24, 0], sizes = [8, 32], strides = [1, 1]} : vector<32x32xf32> to vector<8x32xf32>
    %cst_42 = arith.constant dense<0.000000e+00> : vector<16x32xf32>
    %106 = tpu.matmul %102, %105, %cst_42 {dimension_numbers = #tpu.dot_dimension_numbers<[1], [0], [0], [1], [0, 0, 1, 1], [], []>} : vector<16x8xf32>, vector<8x32xf32>, vector<16x32xf32> -> vector<16x32xf32>
    %107 = arith.addf %86, %106 : vector<16x32xf32>
    %108 = arith.addf %3, %107 : vector<16x32xf32>
    %109 = vector.broadcast %6 : vector<1x32xf32> to vector<16x32xf32>
    %110 = arith.addf %108, %109 : vector<16x32xf32>
    %cst_43 = arith.constant dense<0.000000e+00> : vector<16xf32>
    %111 = vector.multi_reduction <add>, %110, %cst_43 [1] : vector<16x32xf32> to vector<16xf32>
    %112 = vector.shape_cast %111 : vector<16xf32> to vector<16x1xf32>
    %cst_44 = arith.constant 3.200000e+01 : f32
    %113 = vector.broadcast %cst_44 : f32 to vector<16x1xf32>
    %114 = arith.divf %112, %113 : vector<16x1xf32>
    %115 = vector.broadcast %114 : vector<16x1xf32> to vector<16x32xf32>
    %116 = arith.subf %110, %115 : vector<16x32xf32>
    %117 = arith.mulf %116, %116 : vector<16x32xf32>
    %cst_45 = arith.constant dense<0.000000e+00> : vector<16xf32>
    %118 = vector.multi_reduction <add>, %117, %cst_45 [1] : vector<16x32xf32> to vector<16xf32>
    %119 = vector.shape_cast %118 : vector<16xf32> to vector<16x1xf32>
    %cst_46 = arith.constant 3.200000e+01 : f32
    %120 = vector.broadcast %cst_46 : f32 to vector<16x1xf32>
    %121 = arith.divf %119, %120 : vector<16x1xf32>
    %cst_47 = arith.constant 9.99999974E-6 : f32
    %122 = vector.broadcast %cst_47 : f32 to vector<16x1xf32>
    %123 = arith.addf %121, %122 : vector<16x1xf32>
    %124 = math.rsqrt %123 : vector<16x1xf32>
    %125 = vector.broadcast %124 : vector<16x1xf32> to vector<16x32xf32>
    %126 = arith.mulf %116, %125 : vector<16x32xf32>
    %127 = vector.broadcast %7 : vector<1x32xf32> to vector<16x32xf32>
    %128 = arith.mulf %126, %127 : vector<16x32xf32>
    %129 = vector.broadcast %8 : vector<1x32xf32> to vector<16x32xf32>
    %130 = arith.addf %128, %129 : vector<16x32xf32>
    %c0_48 = arith.constant 0 : index
    %c0_49 = arith.constant 0 : index
    %c0_50 = arith.constant 0 : index
    %131 = vector.load %arg8[%c0_48, %c0_49, %c0_50] : memref<1x32x128xf32, #tpu.memory_space<vmem>>, vector<1x32x128xf32>
    %132 = vector.shape_cast %131 : vector<1x32x128xf32> to vector<32x128xf32>
    %cst_51 = arith.constant dense<0.000000e+00> : vector<16x128xf32>
    %133 = tpu.matmul %130, %132, %cst_51 {dimension_numbers = #tpu.dot_dimension_numbers<[1], [0], [0], [1], [0, 0, 1, 1], [], []>} : vector<16x32xf32>, vector<32x128xf32>, vector<16x128xf32> -> vector<16x128xf32>
    %c0_52 = arith.constant 0 : index
    %c0_53 = arith.constant 0 : index
    %c0_54 = arith.constant 0 : index
    %134 = vector.load %arg9[%c0_52, %c0_53, %c0_54] : memref<1x1x128xf32, #tpu.memory_space<vmem>>, vector<1x1x128xf32>
    %135 = vector.shape_cast %134 : vector<1x1x128xf32> to vector<1x128xf32>
    %136 = vector.broadcast %135 : vector<1x128xf32> to vector<16x128xf32>
    %137 = arith.addf %133, %136 : vector<16x128xf32>
    %cst_55 = arith.constant 5.000000e-01 : f32
    %138 = vector.broadcast %cst_55 : f32 to vector<16x128xf32>
    %139 = arith.mulf %138, %137 : vector<16x128xf32>
    %cst_56 = arith.constant 0.707106769 : f32
    %140 = vector.broadcast %cst_56 : f32 to vector<16x128xf32>
    %141 = arith.mulf %137, %140 : vector<16x128xf32>
    %142 = math.absf %141 : vector<16x128xf32>
    %cst_57 = arith.constant 0.327591091 : f32
    %143 = vector.broadcast %cst_57 : f32 to vector<16x128xf32>
    %144 = arith.mulf %143, %142 : vector<16x128xf32>
    %cst_58 = arith.constant 1.000000e+00 : f32
    %145 = vector.broadcast %cst_58 : f32 to vector<16x128xf32>
    %146 = arith.addf %145, %144 : vector<16x128xf32>
    %cst_59 = arith.constant 1.000000e+00 : f32
    %147 = vector.broadcast %cst_59 : f32 to vector<16x128xf32>
    %148 = arith.divf %147, %146 : vector<16x128xf32>
    %cst_60 = arith.constant 1.06140542 : f32
    %149 = vector.broadcast %cst_60 : f32 to vector<16x128xf32>
    %150 = arith.mulf %149, %148 : vector<16x128xf32>
    %cst_61 = arith.constant -1.45315206 : f32
    %151 = vector.broadcast %cst_61 : f32 to vector<16x128xf32>
    %152 = arith.addf %150, %151 : vector<16x128xf32>
    %153 = arith.mulf %152, %148 : vector<16x128xf32>
    %cst_62 = arith.constant 1.42141378 : f32
    %154 = vector.broadcast %cst_62 : f32 to vector<16x128xf32>
    %155 = arith.addf %153, %154 : vector<16x128xf32>
    %156 = arith.mulf %155, %148 : vector<16x128xf32>
    %cst_63 = arith.constant -0.284496725 : f32
    %157 = vector.broadcast %cst_63 : f32 to vector<16x128xf32>
    %158 = arith.addf %156, %157 : vector<16x128xf32>
    %159 = arith.mulf %158, %148 : vector<16x128xf32>
    %cst_64 = arith.constant 0.254829586 : f32
    %160 = vector.broadcast %cst_64 : f32 to vector<16x128xf32>
    %161 = arith.addf %159, %160 : vector<16x128xf32>
    %162 = arith.mulf %161, %148 : vector<16x128xf32>
    %cst_65 = arith.constant 0.000000e+00 : f32
    %163 = vector.broadcast %cst_65 : f32 to vector<16x128xf32>
    %164 = arith.subf %163, %142 : vector<16x128xf32>
    %165 = arith.mulf %164, %142 : vector<16x128xf32>
    %166 = math.exp %165 : vector<16x128xf32>
    %167 = arith.mulf %162, %166 : vector<16x128xf32>
    %cst_66 = arith.constant 1.000000e+00 : f32
    %168 = vector.broadcast %cst_66 : f32 to vector<16x128xf32>
    %169 = arith.subf %168, %167 : vector<16x128xf32>
    %cst_67 = arith.constant 0.000000e+00 : f32
    %170 = vector.broadcast %cst_67 : f32 to vector<16x128xf32>
    %171 = arith.cmpf oge, %141, %170 : vector<16x128xf32>
    %cst_68 = arith.constant 0.000000e+00 : f32
    %172 = vector.broadcast %cst_68 : f32 to vector<16x128xf32>
    %173 = arith.subf %172, %169 : vector<16x128xf32>
    %174 = arith.select %171, %169, %173 : vector<16x128xi1>, vector<16x128xf32>
    %cst_69 = arith.constant 1.000000e+00 : f32
    %175 = vector.broadcast %cst_69 : f32 to vector<16x128xf32>
    %176 = arith.addf %175, %174 : vector<16x128xf32>
    %177 = arith.mulf %139, %176 : vector<16x128xf32>
    %c0_70 = arith.constant 0 : index
    %c0_71 = arith.constant 0 : index
    %c0_72 = arith.constant 0 : index
    %178 = vector.load %arg10[%c0_70, %c0_71, %c0_72] : memref<1x128x32xf32, #tpu.memory_space<vmem>>, vector<1x128x32xf32>
    %179 = vector.shape_cast %178 : vector<1x128x32xf32> to vector<128x32xf32>
    %cst_73 = arith.constant dense<0.000000e+00> : vector<16x32xf32>
    %180 = tpu.matmul %177, %179, %cst_73 {dimension_numbers = #tpu.dot_dimension_numbers<[1], [0], [0], [1], [0, 0, 1, 1], [], []>} : vector<16x128xf32>, vector<128x32xf32>, vector<16x32xf32> -> vector<16x32xf32>
    %181 = vector.broadcast %9 : vector<1x32xf32> to vector<16x32xf32>
    %182 = arith.addf %180, %181 : vector<16x32xf32>
    %183 = arith.addf %130, %182 : vector<16x32xf32>
    %cst_74 = arith.constant dense<0.000000e+00> : vector<16xf32>
    %184 = vector.multi_reduction <add>, %183, %cst_74 [1] : vector<16x32xf32> to vector<16xf32>
    %185 = vector.shape_cast %184 : vector<16xf32> to vector<16x1xf32>
    %cst_75 = arith.constant 3.200000e+01 : f32
    %186 = vector.broadcast %cst_75 : f32 to vector<16x1xf32>
    %187 = arith.divf %185, %186 : vector<16x1xf32>
    %188 = vector.broadcast %187 : vector<16x1xf32> to vector<16x32xf32>
    %189 = arith.subf %183, %188 : vector<16x32xf32>
    %190 = arith.mulf %189, %189 : vector<16x32xf32>
    %cst_76 = arith.constant dense<0.000000e+00> : vector<16xf32>
    %191 = vector.multi_reduction <add>, %190, %cst_76 [1] : vector<16x32xf32> to vector<16xf32>
    %192 = vector.shape_cast %191 : vector<16xf32> to vector<16x1xf32>
    %cst_77 = arith.constant 3.200000e+01 : f32
    %193 = vector.broadcast %cst_77 : f32 to vector<16x1xf32>
    %194 = arith.divf %192, %193 : vector<16x1xf32>
    %cst_78 = arith.constant 9.99999974E-6 : f32
    %195 = vector.broadcast %cst_78 : f32 to vector<16x1xf32>
    %196 = arith.addf %194, %195 : vector<16x1xf32>
    %197 = math.rsqrt %196 : vector<16x1xf32>
    %198 = vector.broadcast %197 : vector<16x1xf32> to vector<16x32xf32>
    %199 = arith.mulf %189, %198 : vector<16x32xf32>
    %200 = vector.broadcast %10 : vector<1x32xf32> to vector<16x32xf32>
    %201 = arith.mulf %199, %200 : vector<16x32xf32>
    %202 = vector.broadcast %11 : vector<1x32xf32> to vector<16x32xf32>
    %203 = arith.addf %201, %202 : vector<16x32xf32>
    %c0_79 = arith.constant 0 : index
    %c0_80 = arith.constant 0 : index
    %204 = vector.load %arg15[%c0_79, %c0_80] : memref<16x32xf32, #tpu.memory_space<vmem>>, vector<16x32xf32>
    tpu.vector_store %arg15[%c0_79, %c0_80], %203 {strides = array<i32>} : memref<16x32xf32, #tpu.memory_space<vmem>>, vector<16x32xf32>,
    %c1_i32 = arith.constant 1 : i32
    %205 = arith.cmpi eq, %arg1, %c1_i32 : i32
    %206 = arith.extui %205 : i1 to i32
    %c0_i32_81 = arith.constant 0 : i32
    %207 = arith.cmpi ne, %206, %c0_i32_81 : i32
    scf.if %207 {
      %208 = vector.shape_cast %203 : vector<16x32xf32> to vector<2x8x32xf32>
      %cst_82 = arith.constant dense<0.000000e+00> : vector<2x32xf32>
      %209 = vector.multi_reduction <add>, %208, %cst_82 [1] : vector<2x8x32xf32> to vector<2x32xf32>
      %cst_83 = arith.constant 8.000000e+00 : f32
      %210 = vector.broadcast %cst_83 : f32 to vector<2x32xf32>
      %211 = arith.divf %209, %210 : vector<2x32xf32>
      %c0_84 = arith.constant 0 : index
      %c0_85 = arith.constant 0 : index
      %212 = vector.load %arg12[%c0_84, %c0_85] : memref<32x1xf32, #tpu.memory_space<vmem>>, vector<32x1xf32>
      %cst_86 = arith.constant dense<0.000000e+00> : vector<2x1xf32>
      %213 = tpu.matmul %211, %212, %cst_86 {dimension_numbers = #tpu.dot_dimension_numbers<[1], [0], [0], [1], [0, 0, 1, 1], [], []>} : vector<2x32xf32>, vector<32x1xf32>, vector<2x1xf32> -> vector<2x1xf32>
      %c0_87 = arith.constant 0 : index
      %c0_88 = arith.constant 0 : index
      %214 = vector.load %arg13[%c0_87, %c0_88] : memref<1x1xf32, #tpu.memory_space<vmem>>, vector<1x1xf32>
      %215 = vector.broadcast %214 : vector<1x1xf32> to vector<2x1xf32>
      %216 = arith.addf %213, %215 : vector<2x1xf32>
      %c0_89 = arith.constant 0 : index
      %c0_90 = arith.constant 0 : index
      %217 = vector.load %arg14[%c0_89, %c0_90] : memref<2x1xf32, #tpu.memory_space<vmem>>, vector<2x1xf32>
      tpu.vector_store %arg14[%c0_89, %c0_90], %216 {strides = array<i32>} : memref<2x1xf32, #tpu.memory_space<vmem>>, vector<2x1xf32>,
    } else {
    }
    return
  }
  func.func @transform_0(%arg0: i32, %arg1: i32) -> (i32, i32, i32) {
    %c0_i32 = arith.constant 0 : i32
    %c0_i32_0 = arith.constant 0 : i32
    %c0_i32_1 = arith.constant 0 : i32
    return %arg0, %c0_i32, %c0_i32_0 : i32, i32, i32
  }
  func.func @transform_1(%arg0: i32, %arg1: i32) -> (i32, i32) {
    %c0_i32 = arith.constant 0 : i32
    %c0_i32_0 = arith.constant 0 : i32
    %c0_i32_1 = arith.constant 0 : i32
    return %c0_i32, %c0_i32_0 : i32, i32
  }
  func.func @transform_2(%arg0: i32, %arg1: i32) -> (i32, i32) {
    %c0_i32 = arith.constant 0 : i32
    %c0_i32_0 = arith.constant 0 : i32
    %c0_i32_1 = arith.constant 0 : i32
    return %c0_i32, %c0_i32_0 : i32, i32
  }
  func.func @transform_3(%arg0: i32, %arg1: i32) -> (i32, i32, i32) {
    %c0_i32 = arith.constant 0 : i32
    %c0_i32_0 = arith.constant 0 : i32
    %c0_i32_1 = arith.constant 0 : i32
    return %arg1, %c0_i32, %c0_i32_0 : i32, i32, i32
  }
  func.func @transform_4(%arg0: i32, %arg1: i32) -> (i32, i32, i32) {
    %c0_i32 = arith.constant 0 : i32
    %c0_i32_0 = arith.constant 0 : i32
    %c0_i32_1 = arith.constant 0 : i32
    return %arg1, %c0_i32, %c0_i32_0 : i32, i32, i32
  }
  func.func @transform_5(%arg0: i32, %arg1: i32) -> (i32, i32, i32) {
    %c0_i32 = arith.constant 0 : i32
    %c0_i32_0 = arith.constant 0 : i32
    %c0_i32_1 = arith.constant 0 : i32
    return %arg1, %c0_i32, %c0_i32_0 : i32, i32, i32
  }
  func.func @transform_6(%arg0: i32, %arg1: i32) -> (i32, i32, i32) {
    %c0_i32 = arith.constant 0 : i32
    %c0_i32_0 = arith.constant 0 : i32
    %c0_i32_1 = arith.constant 0 : i32
    return %arg1, %c0_i32, %c0_i32_0 : i32, i32, i32
  }
  func.func @transform_7(%arg0: i32, %arg1: i32) -> (i32, i32, i32) {
    %c0_i32 = arith.constant 0 : i32
    %c0_i32_0 = arith.constant 0 : i32
    %c0_i32_1 = arith.constant 0 : i32
    return %arg1, %c0_i32, %c0_i32_0 : i32, i32, i32
  }
  func.func @transform_8(%arg0: i32, %arg1: i32) -> (i32, i32, i32) {
    %c0_i32 = arith.constant 0 : i32
    %c0_i32_0 = arith.constant 0 : i32
    %c0_i32_1 = arith.constant 0 : i32
    return %arg1, %c0_i32, %c0_i32_0 : i32, i32, i32
  }
  func.func @transform_9(%arg0: i32, %arg1: i32) -> (i32, i32, i32) {
    %c0_i32 = arith.constant 0 : i32
    %c0_i32_0 = arith.constant 0 : i32
    %c0_i32_1 = arith.constant 0 : i32
    return %arg1, %c0_i32, %c0_i32_0 : i32, i32, i32
  }
  func.func @transform_10(%arg0: i32, %arg1: i32) -> (i32, i32) {
    %c0_i32 = arith.constant 0 : i32
    %c0_i32_0 = arith.constant 0 : i32
    %c0_i32_1 = arith.constant 0 : i32
    return %c0_i32, %c0_i32_0 : i32, i32
  }
  func.func @transform_11(%arg0: i32, %arg1: i32) -> (i32, i32) {
    %c0_i32 = arith.constant 0 : i32
    %c0_i32_0 = arith.constant 0 : i32
    %c0_i32_1 = arith.constant 0 : i32
    return %c0_i32, %c0_i32_0 : i32, i32
  }
  func.func @transform_12(%arg0: i32, %arg1: i32) -> (i32, i32) {
    %c0_i32 = arith.constant 0 : i32
    %c0_i32_0 = arith.constant 0 : i32
    return %arg0, %c0_i32 : i32, i32
  }
}

</mosaic_0001>

<llo_original>
// kernel: tpu_custom_call.1
$region0: #{tpu_custom_call.1}
  #allocation0 [shape = 'u32[]', space=smem, size = 0x4, offset = 0x4, fixed_abs, tag = 'smem constant byte address 0x4 - core index']
  #allocation1 [shape = 'u32[72,128]{1,0:T(1,128)}', space=vmem, size = 0x9000, scoped, tag = 'internal scratch']
  #allocation2 [shape = 'f32[16,32]{1,0:T(8,128)}', space=vmem, size = 0x2000, scoped, tag = 'scratch operand']
  #allocation3 [shape = 'f32[1,1]{1,0:T(1,128)S(1)}', space=vmem, size = 0x200, scoped, tag = 'scoped memory for tpu_custom_call.1']
  %s0 = inlined_call_operand.vmem [shape: f32[2,8,4], index: 0, kind: input, shape index: {}]
  %s1 = inlined_call_operand.vmem [shape: f32[4,32], index: 1, kind: input, shape index: {}]
  %s2 = inlined_call_operand.vmem [shape: f32[8,32], index: 2, kind: input, shape index: {}]
  %s3 = inlined_call_operand.vmem [shape: f32[2,32,96], index: 3, kind: input, shape index: {}]
  %s4 = inlined_call_operand.vmem [shape: f32[2,1,96], index: 4, kind: input, shape index: {}]
  %s5 = inlined_call_operand.vmem [shape: f32[2,32,32], index: 5, kind: input, shape index: {}]
  %s6 = inlined_call_operand.vmem [shape: f32[2,32,128], index: 6, kind: input, shape index: {}]
  %s7 = inlined_call_operand.vmem [shape: f32[2,1,128], index: 7, kind: input, shape index: {}]
  %s8 = inlined_call_operand.vmem [shape: f32[2,128,32], index: 8, kind: input, shape index: {}]
  %s9 = inlined_call_operand.vmem [shape: f32[2,6,32], index: 9, kind: input, shape index: {}]
  %s10 = inlined_call_operand.vmem [shape: f32[32,1], index: 10, kind: input, shape index: {}]
  %s11 = inlined_call_operand.<no memory space> [shape: f32[1,1], index: 11, kind: input, shape index: {}]
  %s12 = inlined_call_operand.vmem [shape: f32[2,1], index: 12, kind: output, shape index: {}]
  %s13 = sld [smem:[#allocation0]]
  $region89: #{tpu_custom_call.1} parent=0
    _
  %s15 = ssub.s32 1, %s13
  %s16 = scalar_select 0, %s15, %s13
  %v17 = vstv %s11
  %18 = vst [vmem:[#allocation3] sm:$0x1] %v17
  loop: start=0, step=1, limit=4
  $region2: #{tpu_custom_call.1} parent=0 // loop_pre_header
    _
  $region3: #{tpu_custom_call.1} parent=0 // loop_header
    %s20 = sphi 0, %s24
    %p21 = scmp.ge.s32.totalorder %s20, 4
    %s27 = sphi 0, %s39
    %s28 = sphi 0, %s35
    %s29 = sphi 0, %s27
    %s30 = sphi 0, %s28
    %s31 = sphi 0, %s29
    %s32 = sphi 0, %s30
    %s42 = sphi 0, %s44
    %s45 = sphi 0, %s42
    %s46 = sphi 0, %s45
    %s62 = sphi 0, %s46
    %s66 = sphi 0, %s66
    %s68 = sphi 0, %s66
    %s69 = sphi 0, %s68
    %s83 = sphi 0, %s69
    %s87 = sphi 0, %s87
    %s89 = sphi 0, %s87
    %s90 = sphi 0, %s89
    %s104 = sphi 0, %s90
    %s110 = sphi 0, %s112
    %s113 = sphi 0, %s110
    %s114 = sphi 0, %s113
    %s130 = sphi 0, %s114
    %s136 = sphi 0, %s138
    %s139 = sphi 0, %s136
    %s140 = sphi 0, %s139
    %s156 = sphi 0, %s140
    %s162 = sphi 0, %s164
    %s165 = sphi 0, %s162
    %s166 = sphi 0, %s165
    %s182 = sphi 0, %s166
    %s188 = sphi 0, %s190
    %s191 = sphi 0, %s188
    %s192 = sphi 0, %s191
    %s208 = sphi 0, %s192
    %s214 = sphi 0, %s216
    %s217 = sphi 0, %s214
    %s218 = sphi 0, %s217
    %s234 = sphi 0, %s218
    %s240 = sphi 0, %s242
    %s243 = sphi 0, %s240
    %s244 = sphi 0, %s243
    %s260 = sphi 0, %s244
    %s266 = sphi 0, %s268
    %s269 = sphi 0, %s266
    %s270 = sphi 0, %s269
    %s286 = sphi 0, %s270
    %s290 = sphi 0, %s290
    %s292 = sphi 0, %s290
    %s293 = sphi 0, %s292
    %s307 = sphi 0, %s293
    %s311 = sphi 0, %s311
    %s313 = sphi 0, %s311
    %s314 = sphi 0, %s313
    %s328 = sphi 0, %s314
    %s334 = sphi 0, %s336
    %s337 = sphi 0, %s334
    %s338 = sphi 0, %s337
    %s354 = sphi 0, %s338
  $region4: #{tpu_custom_call.1} parent=0 // loop_header_branch
    %23 = sbr.rel (%p21) target = $region8
  $region5: #{tpu_custom_call.1} parent=0 // loop_body
    %s25 = ssub.s32 %s20, 1
    %s26 = ssub.s32 %s20, 2
    %s33 = sadd.s32 1, %s28
    %p34 = scmp.ge.s32.totalorder %s33, 2
    %s35 = scalar_select %p34, 0, %s33
    %s36 = sadd.s32 1, %s27
    %s37 = scalar_select %p34, %s36, %s27
    %p38 = scmp.ge.s32.totalorder %s37, 1
    %s39 = scalar_select %p38, 0, %s37
    %s40 = ssub.s32 %s27, %s39
    %p41 = scmp.eq.s32.totalorder %s40, 0
    %s43 = sadd.s32 %s42, 1
    %s44 = scalar_select %p41, %s42, %s43
    %p47 = pneg %p41
    %p48 = scmp.eq.s32.totalorder %s20, 1
    %p49 = por %p47, %p48
    %p50 = scmp.ne.s32.totalorder %s42, %s45
    %p51 = scmp.eq.s32.totalorder %s20, 0
    %p52 = por %p50, %p51
    %p53 = scmp.ne.s32.totalorder %s42, %s45
    %p54 = scmp.eq.s32.totalorder %s25, 1
    %p55 = por %p53, %p54
    %p56 = scmp.ne.s32.totalorder %s45, %s46
    %p57 = scmp.eq.s32.totalorder %s25, 0
    %p58 = por %p56, %p57
    %p59 = scmp.ne.s32.totalorder %s45, %s46
    %p60 = scmp.eq.s32.totalorder %s26, 1
    %p61 = por %p59, %p60
    %p63 = scmp.ne.s32.totalorder %s46, %s62
    %p64 = scmp.eq.s32.totalorder %s26, 0
    %p65 = por %p63, %p64
    %s67 = sadd.s32 %s66, 1
    %p70 = scmp.eq.s32.totalorder %s20, 1
    %p71 = scmp.ne.s32.totalorder %s66, %s68
    %p72 = scmp.eq.s32.totalorder %s20, 0
    %p73 = por %p71, %p72
    %p74 = scmp.ne.s32.totalorder %s66, %s68
    %p75 = scmp.eq.s32.totalorder %s25, 1
    %p76 = por %p74, %p75
    %p77 = scmp.ne.s32.totalorder %s68, %s69
    %p78 = scmp.eq.s32.totalorder %s25, 0
    %p79 = por %p77, %p78
    %p80 = scmp.ne.s32.totalorder %s68, %s69
    %p81 = scmp.eq.s32.totalorder %s26, 1
    %p82 = por %p80, %p81
    %p84 = scmp.ne.s32.totalorder %s69, %s83
    %p85 = scmp.eq.s32.totalorder %s26, 0
    %p86 = por %p84, %p85
    %s88 = sadd.s32 %s87, 1
    %p91 = scmp.eq.s32.totalorder %s20, 1
    %p92 = scmp.ne.s32.totalorder %s87, %s89
    %p93 = scmp.eq.s32.totalorder %s20, 0
    %p94 = por %p92, %p93
    %p95 = scmp.ne.s32.totalorder %s87, %s89
    %p96 = scmp.eq.s32.totalorder %s25, 1
    %p97 = por %p95, %p96
    %p98 = scmp.ne.s32.totalorder %s89, %s90
    %p99 = scmp.eq.s32.totalorder %s25, 0
    %p100 = por %p98, %p99
    %p101 = scmp.ne.s32.totalorder %s89, %s90
    %p102 = scmp.eq.s32.totalorder %s26, 1
    %p103 = por %p101, %p102
    %p105 = scmp.ne.s32.totalorder %s90, %s104
    %p106 = scmp.eq.s32.totalorder %s26, 0
    %p107 = por %p105, %p106
    %s108 = ssub.s32 %s28, %s35
    %p109 = scmp.eq.s32.totalorder %s108, 0
    %s111 = sadd.s32 %s110, 1
    %s112 = scalar_select %p109, %s110, %s111
    %p115 = pneg %p109
    %p116 = scmp.eq.s32.totalorder %s20, 1
    %p117 = por %p115, %p116
    %p118 = scmp.ne.s32.totalorder %s110, %s113
    %p119 = scmp.eq.s32.totalorder %s20, 0
    %p120 = por %p118, %p119
    %p121 = scmp.ne.s32.totalorder %s110, %s113
    %p122 = scmp.eq.s32.totalorder %s25, 1
    %p123 = por %p121, %p122
    %p124 = scmp.ne.s32.totalorder %s113, %s114
    %p125 = scmp.eq.s32.totalorder %s25, 0
    %p126 = por %p124, %p125
    %p127 = scmp.ne.s32.totalorder %s113, %s114
    %p128 = scmp.eq.s32.totalorder %s26, 1
    %p129 = por %p127, %p128
    %p131 = scmp.ne.s32.totalorder %s114, %s130
    %p132 = scmp.eq.s32.totalorder %s26, 0
    %p133 = por %p131, %p132
    %s134 = ssub.s32 %s28, %s35
    %p135 = scmp.eq.s32.totalorder %s134, 0
    %s137 = sadd.s32 %s136, 1
    %s138 = scalar_select %p135, %s136, %s137
    %p141 = pneg %p135
    %p142 = scmp.eq.s32.totalorder %s20, 1
    %p143 = por %p141, %p142
    %p144 = scmp.ne.s32.totalorder %s136, %s139
    %p145 = scmp.eq.s32.totalorder %s20, 0
    %p146 = por %p144, %p145
    %p147 = scmp.ne.s32.totalorder %s136, %s139
    %p148 = scmp.eq.s32.totalorder %s25, 1
    %p149 = por %p147, %p148
    %p150 = scmp.ne.s32.totalorder %s139, %s140
    %p151 = scmp.eq.s32.totalorder %s25, 0
    %p152 = por %p150, %p151
    %p153 = scmp.ne.s32.totalorder %s139, %s140
    %p154 = scmp.eq.s32.totalorder %s26, 1
    %p155 = por %p153, %p154
    %p157 = scmp.ne.s32.totalorder %s140, %s156
    %p158 = scmp.eq.s32.totalorder %s26, 0
    %p159 = por %p157, %p158
    %s160 = ssub.s32 %s28, %s35
    %p161 = scmp.eq.s32.totalorder %s160, 0
    %s163 = sadd.s32 %s162, 1
    %s164 = scalar_select %p161, %s162, %s163
    %p167 = pneg %p161
    %p168 = scmp.eq.s32.totalorder %s20, 1
    %p169 = por %p167, %p168
    %p170 = scmp.ne.s32.totalorder %s162, %s165
    %p171 = scmp.eq.s32.totalorder %s20, 0
    %p172 = por %p170, %p171
    %p173 = scmp.ne.s32.totalorder %s162, %s165
    %p174 = scmp.eq.s32.totalorder %s25, 1
    %p175 = por %p173, %p174
    %p176 = scmp.ne.s32.totalorder %s165, %s166
    %p177 = scmp.eq.s32.totalorder %s25, 0
    %p178 = por %p176, %p177
    %p179 = scmp.ne.s32.totalorder %s165, %s166
    %p180 = scmp.eq.s32.totalorder %s26, 1
    %p181 = por %p179, %p180
    %p183 = scmp.ne.s32.totalorder %s166, %s182
    %p184 = scmp.eq.s32.totalorder %s26, 0
    %p185 = por %p183, %p184
    %s186 = ssub.s32 %s28, %s35
    %p187 = scmp.eq.s32.totalorder %s186, 0
    %s189 = sadd.s32 %s188, 1
    %s190 = scalar_select %p187, %s188, %s189
    %p193 = pneg %p187
    %p194 = scmp.eq.s32.totalorder %s20, 1
    %p195 = por %p193, %p194
    %p196 = scmp.ne.s32.totalorder %s188, %s191
    %p197 = scmp.eq.s32.totalorder %s20, 0
    %p198 = por %p196, %p197
    %p199 = scmp.ne.s32.totalorder %s188, %s191
    %p200 = scmp.eq.s32.totalorder %s25, 1
    %p201 = por %p199, %p200
    %p202 = scmp.ne.s32.totalorder %s191, %s192
    %p203 = scmp.eq.s32.totalorder %s25, 0
    %p204 = por %p202, %p203
    %p205 = scmp.ne.s32.totalorder %s191, %s192
    %p206 = scmp.eq.s32.totalorder %s26, 1
    %p207 = por %p205, %p206
    %p209 = scmp.ne.s32.totalorder %s192, %s208
    %p210 = scmp.eq.s32.totalorder %s26, 0
    %p211 = por %p209, %p210
    %s212 = ssub.s32 %s28, %s35
    %p213 = scmp.eq.s32.totalorder %s212, 0
    %s215 = sadd.s32 %s214, 1
    %s216 = scalar_select %p213, %s214, %s215
    %p219 = pneg %p213
    %p220 = scmp.eq.s32.totalorder %s20, 1
    %p221 = por %p219, %p220
    %p222 = scmp.ne.s32.totalorder %s214, %s217
    %p223 = scmp.eq.s32.totalorder %s20, 0
    %p224 = por %p222, %p223
    %p225 = scmp.ne.s32.totalorder %s214, %s217
    %p226 = scmp.eq.s32.totalorder %s25, 1
    %p227 = por %p225, %p226
    %p228 = scmp.ne.s32.totalorder %s217, %s218
    %p229 = scmp.eq.s32.totalorder %s25, 0
    %p230 = por %p228, %p229
    %p231 = scmp.ne.s32.totalorder %s217, %s218
    %p232 = scmp.eq.s32.totalorder %s26, 1
    %p233 = por %p231, %p232
    %p235 = scmp.ne.s32.totalorder %s218, %s234
    %p236 = scmp.eq.s32.totalorder %s26, 0
    %p237 = por %p235, %p236
    %s238 = ssub.s32 %s28, %s35
    %p239 = scmp.eq.s32.totalorder %s238, 0
    %s241 = sadd.s32 %s240, 1
    %s242 = scalar_select %p239, %s240, %s241
    %p245 = pneg %p239
    %p246 = scmp.eq.s32.totalorder %s20, 1
    %p247 = por %p245, %p246
    %p248 = scmp.ne.s32.totalorder %s240, %s243
    %p249 = scmp.eq.s32.totalorder %s20, 0
    %p250 = por %p248, %p249
    %p251 = scmp.ne.s32.totalorder %s240, %s243
    %p252 = scmp.eq.s32.totalorder %s25, 1
    %p253 = por %p251, %p252
    %p254 = scmp.ne.s32.totalorder %s243, %s244
    %p255 = scmp.eq.s32.totalorder %s25, 0
    %p256 = por %p254, %p255
    %p257 = scmp.ne.s32.totalorder %s243, %s244
    %p258 = scmp.eq.s32.totalorder %s26, 1
    %p259 = por %p257, %p258
    %p261 = scmp.ne.s32.totalorder %s244, %s260
    %p262 = scmp.eq.s32.totalorder %s26, 0
    %p263 = por %p261, %p262
    %s264 = ssub.s32 %s28, %s35
    %p265 = scmp.eq.s32.totalorder %s264, 0
    %s267 = sadd.s32 %s266, 1
    %s268 = scalar_select %p265, %s266, %s267
    %p271 = pneg %p265
    %p272 = scmp.eq.s32.totalorder %s20, 1
    %p273 = por %p271, %p272
    %p274 = scmp.ne.s32.totalorder %s266, %s269
    %p275 = scmp.eq.s32.totalorder %s20, 0
    %p276 = por %p274, %p275
    %p277 = scmp.ne.s32.totalorder %s266, %s269
    %p278 = scmp.eq.s32.totalorder %s25, 1
    %p279 = por %p277, %p278
    %p280 = scmp.ne.s32.totalorder %s269, %s270
    %p281 = scmp.eq.s32.totalorder %s25, 0
    %p282 = por %p280, %p281
    %p283 = scmp.ne.s32.totalorder %s269, %s270
    %p284 = scmp.eq.s32.totalorder %s26, 1
    %p285 = por %p283, %p284
    %p287 = scmp.ne.s32.totalorder %s270, %s286
    %p288 = scmp.eq.s32.totalorder %s26, 0
    %p289 = por %p287, %p288
    %s291 = sadd.s32 %s290, 1
    %p294 = scmp.eq.s32.totalorder %s20, 1
    %p295 = scmp.ne.s32.totalorder %s290, %s292
    %p296 = scmp.eq.s32.totalorder %s20, 0
    %p297 = por %p295, %p296
    %p298 = scmp.ne.s32.totalorder %s290, %s292
    %p299 = scmp.eq.s32.totalorder %s25, 1
    %p300 = por %p298, %p299
    %p301 = scmp.ne.s32.totalorder %s292, %s293
    %p302 = scmp.eq.s32.totalorder %s25, 0
    %p303 = por %p301, %p302
    %p304 = scmp.ne.s32.totalorder %s292, %s293
    %p305 = scmp.eq.s32.totalorder %s26, 1
    %p306 = por %p304, %p305
    %p308 = scmp.ne.s32.totalorder %s293, %s307
    %p309 = scmp.eq.s32.totalorder %s26, 0
    %p310 = por %p308, %p309
    %s312 = sadd.s32 %s311, 1
    %p315 = scmp.eq.s32.totalorder %s20, 1
    %p316 = scmp.ne.s32.totalorder %s311, %s313
    %p317 = scmp.eq.s32.totalorder %s20, 0
    %p318 = por %p316, %p317
    %p319 = scmp.ne.s32.totalorder %s311, %s313
    %p320 = scmp.eq.s32.totalorder %s25, 1
    %p321 = por %p319, %p320
    %p322 = scmp.ne.s32.totalorder %s313, %s314
    %p323 = scmp.eq.s32.totalorder %s25, 0
    %p324 = por %p322, %p323
    %p325 = scmp.ne.s32.totalorder %s313, %s314
    %p326 = scmp.eq.s32.totalorder %s26, 1
    %p327 = por %p325, %p326
    %p329 = scmp.ne.s32.totalorder %s314, %s328
    %p330 = scmp.eq.s32.totalorder %s26, 0
    %p331 = por %p329, %p330
    %s332 = ssub.s32 %s27, %s39
    %p333 = scmp.eq.s32.totalorder %s332, 0
    %s335 = sadd.s32 %s334, 1
    %s336 = scalar_select %p333, %s334, %s335
    %p339 = pneg %p333
    %p340 = scmp.eq.s32.totalorder %s20, 1
    %p341 = por %p339, %p340
    %p342 = scmp.ne.s32.totalorder %s334, %s337
    %p343 = scmp.eq.s32.totalorder %s20, 0
    %p344 = por %p342, %p343
    %p345 = scmp.ne.s32.totalorder %s334, %s337
    %p346 = scmp.eq.s32.totalorder %s25, 1
    %p347 = por %p345, %p346
    %p348 = scmp.ne.s32.totalorder %s337, %s338
    %p349 = scmp.eq.s32.totalorder %s25, 0
    %p350 = por %p348, %p349
    %p351 = scmp.ne.s32.totalorder %s337, %s338
    %p352 = scmp.eq.s32.totalorder %s26, 1
    %p353 = por %p351, %p352
    %p355 = scmp.ne.s32.totalorder %s338, %s354
    %p356 = scmp.eq.s32.totalorder %s26, 0
    %p357 = por %p355, %p356
    %p358 = scmp.le.s32.totalorder 1, %s20
    %p359 = scmp.lt.s32.totalorder %s20, 3
    %p360 = pnand %p358, %p359
    %p361 = pneg %p360
    // Predicated region
    $region9: #{tpu_custom_call.1} parent=5 // pred_check
      _
    $region10: #{tpu_custom_call.1} parent=5 // pred_check_branch
      %363 = sbr.rel (%p360) target = $region12
    $region11: #{tpu_custom_call.1} parent=5 // pred_region
      %s364 = ssub.s32 %s20, 1
      // Predicated region
      $region13: #{tpu_custom_call.1} parent=11 // pred_check
        %p365 = pneg %p58
      $region14: #{tpu_custom_call.1} parent=11 // pred_check_branch
        %367 = sbr.rel (%p365) target = $region16
      $region15: #{tpu_custom_call.1} parent=11 // pred_region
        %s368 = smul.u32 2, %s29
        %p369 = scmp.lt.s32.totalorder %s368, 1
        %s370 = scalar_select %p369, %s368, 1
        %s371 = smul.addr %s370, 8
        %s372 = scalar_lea.vmem %s0, %s371
        %s373 = smul.u32 2, %s29
      $region16: #{tpu_custom_call.1} parent=11 // pred_fallthru
        _
      // Predicated region
      $region17: #{tpu_custom_call.1} parent=11 // pred_check
        %p374 = pneg %p79
      $region18: #{tpu_custom_call.1} parent=11 // pred_check_branch
        %376 = sbr.rel (%p374) target = $region20
      $region19: #{tpu_custom_call.1} parent=11 // pred_region
        _
      $region20: #{tpu_custom_call.1} parent=11 // pred_fallthru
        _
      // Predicated region
      $region21: #{tpu_custom_call.1} parent=11 // pred_check
        %p377 = pneg %p100
      $region22: #{tpu_custom_call.1} parent=11 // pred_check_branch
        %379 = sbr.rel (%p377) target = $region24
      $region23: #{tpu_custom_call.1} parent=11 // pred_region
        _
      $region24: #{tpu_custom_call.1} parent=11 // pred_fallthru
        _
      // Predicated region
      $region25: #{tpu_custom_call.1} parent=11 // pred_check
        %p380 = pneg %p303
      $region26: #{tpu_custom_call.1} parent=11 // pred_check_branch
        %382 = sbr.rel (%p380) target = $region28
      $region27: #{tpu_custom_call.1} parent=11 // pred_region
        _
      $region28: #{tpu_custom_call.1} parent=11 // pred_fallthru
        _
      // Predicated region
      $region29: #{tpu_custom_call.1} parent=11 // pred_check
        %p383 = pneg %p324
      $region30: #{tpu_custom_call.1} parent=11 // pred_check_branch
        %385 = sbr.rel (%p383) target = $region32
      $region31: #{tpu_custom_call.1} parent=11 // pred_region
        _
      $region32: #{tpu_custom_call.1} parent=11 // pred_fallthru
        _
    $region12: #{tpu_custom_call.1} parent=5 // pred_fallthru
      _
    %p386 = scmp.lt.s32.totalorder %s20, 2
    // Predicated region
    $region33: #{tpu_custom_call.1} parent=5 // pred_check
      %p387 = pneg %p386
    $region34: #{tpu_custom_call.1} parent=5 // pred_check_branch
      %389 = sbr.rel (%p387) target = $region36
    $region35: #{tpu_custom_call.1} parent=5 // pred_region
      // Predicated region
      $region37: #{tpu_custom_call.1} parent=35 // pred_check
        %p390 = pneg %p120
      $region38: #{tpu_custom_call.1} parent=35 // pred_check_branch
        %392 = sbr.rel (%p390) target = $region40
      $region39: #{tpu_custom_call.1} parent=35 // pred_region
        %p393 = scmp.lt.s32.totalorder %s28, 1
        %s394 = scalar_select %p393, %s28, 1
        %s395 = smul.addr %s394, 4
        %s396 = smul.addr %s395, 8
        %s397 = scalar_lea.vmem %s3, %s396
      $region40: #{tpu_custom_call.1} parent=35 // pred_fallthru
        _
      // Predicated region
      $region41: #{tpu_custom_call.1} parent=35 // pred_check
        %p398 = pneg %p146
      $region42: #{tpu_custom_call.1} parent=35 // pred_check_branch
        %400 = sbr.rel (%p398) target = $region44
      $region43: #{tpu_custom_call.1} parent=35 // pred_region
        %p401 = scmp.lt.s32.totalorder %s28, 1
        %s402 = scalar_select %p401, %s28, 1
        %s403 = scalar_lea.vmem %s4, %s402
      $region44: #{tpu_custom_call.1} parent=35 // pred_fallthru
        _
      // Predicated region
      $region45: #{tpu_custom_call.1} parent=35 // pred_check
        %p404 = pneg %p172
      $region46: #{tpu_custom_call.1} parent=35 // pred_check_branch
        %406 = sbr.rel (%p404) target = $region48
      $region47: #{tpu_custom_call.1} parent=35 // pred_region
        %p407 = scmp.lt.s32.totalorder %s28, 1
        %s408 = scalar_select %p407, %s28, 1
        %s409 = smul.addr %s408, 4
        %s410 = smul.addr %s409, 8
        %s411 = scalar_lea.vmem %s5, %s410
      $region48: #{tpu_custom_call.1} parent=35 // pred_fallthru
        _
      // Predicated region
      $region49: #{tpu_custom_call.1} parent=35 // pred_check
        %p412 = pneg %p198
      $region50: #{tpu_custom_call.1} parent=35 // pred_check_branch
        %414 = sbr.rel (%p412) target = $region52
      $region51: #{tpu_custom_call.1} parent=35 // pred_region
        %p415 = scmp.lt.s32.totalorder %s28, 1
        %s416 = scalar_select %p415, %s28, 1
        %s417 = smul.addr %s416, 4
        %s418 = smul.addr %s417, 8
        %s419 = scalar_lea.vmem %s6, %s418
      $region52: #{tpu_custom_call.1} parent=35 // pred_fallthru
        _
      // Predicated region
      $region53: #{tpu_custom_call.1} parent=35 // pred_check
        %p420 = pneg %p224
      $region54: #{tpu_custom_call.1} parent=35 // pred_check_branch
        %422 = sbr.rel (%p420) target = $region56
      $region55: #{tpu_custom_call.1} parent=35 // pred_region
        %p423 = scmp.lt.s32.totalorder %s28, 1
        %s424 = scalar_select %p423, %s28, 1
        %s425 = scalar_lea.vmem %s7, %s424
      $region56: #{tpu_custom_call.1} parent=35 // pred_fallthru
        _
      // Predicated region
      $region57: #{tpu_custom_call.1} parent=35 // pred_check
        %p426 = pneg %p250
      $region58: #{tpu_custom_call.1} parent=35 // pred_check_branch
        %428 = sbr.rel (%p426) target = $region60
      $region59: #{tpu_custom_call.1} parent=35 // pred_region
        %p429 = scmp.lt.s32.totalorder %s28, 1
        %s430 = scalar_select %p429, %s28, 1
        %s431 = smul.addr %s430, 16
        %s432 = smul.addr %s431, 8
        %s433 = scalar_lea.vmem %s8, %s432
      $region60: #{tpu_custom_call.1} parent=35 // pred_fallthru
        _
      // Predicated region
      $region61: #{tpu_custom_call.1} parent=35 // pred_check
        %p434 = pneg %p276
      $region62: #{tpu_custom_call.1} parent=35 // pred_check_branch
        %436 = sbr.rel (%p434) target = $region64
      $region63: #{tpu_custom_call.1} parent=35 // pred_region
        %p437 = scmp.lt.s32.totalorder %s28, 1
        %s438 = scalar_select %p437, %s28, 1
        %s439 = smul.addr %s438, 8
        %s440 = scalar_lea.vmem %s9, %s439
      $region64: #{tpu_custom_call.1} parent=35 // pred_fallthru
        _
    $region36: #{tpu_custom_call.1} parent=5 // pred_fallthru
      _
    %p441 = scmp.le.s32.totalorder 1, %s20
    %p442 = scmp.lt.s32.totalorder %s20, 3
    %p443 = pnand %p441, %p442
    %p444 = pneg %p443
    // Predicated region
    $region65: #{tpu_custom_call.1} parent=5 // pred_check
      _
    $region66: #{tpu_custom_call.1} parent=5 // pred_check_branch
      %446 = sbr.rel (%p443) target = $region68
    $region67: #{tpu_custom_call.1} parent=5 // pred_region
      %s447 = ssub.s32 %s20, 1
      %s448 = smul.u32 2, %s29
      %p449 = scmp.lt.s32.totalorder %s448, 1
      %s450 = scalar_select %p449, %s448, 1
      %s451 = smul.addr %s450, 8
      %s452 = scalar_lea.vmem %s0, %s451
      %p453 = pneg %p58
      %p454 = pneg %p55
      %p455 = pneg %p79
      %p456 = pneg %p76
      %p457 = pneg %p100
      %p458 = pneg %p97
      %p459 = scmp.lt.s32.totalorder %s30, 1
      %s460 = scalar_select %p459, %s30, 1
      %s461 = smul.addr %s460, 4
      %s462 = smul.addr %s461, 8
      %s463 = scalar_lea.vmem %s3, %s462
      %p464 = pneg %p126
      %p465 = pneg %p123
      %p466 = scmp.lt.s32.totalorder %s30, 1
      %s467 = scalar_select %p466, %s30, 1
      %s468 = scalar_lea.vmem %s4, %s467
      %p469 = pneg %p152
      %p470 = pneg %p149
      %p471 = scmp.lt.s32.totalorder %s30, 1
      %s472 = scalar_select %p471, %s30, 1
      %s473 = smul.addr %s472, 4
      %s474 = smul.addr %s473, 8
      %s475 = scalar_lea.vmem %s5, %s474
      %p476 = pneg %p178
      %p477 = pneg %p175
      %p478 = scmp.lt.s32.totalorder %s30, 1
      %s479 = scalar_select %p478, %s30, 1
      %s480 = smul.addr %s479, 4
      %s481 = smul.addr %s480, 8
      %s482 = scalar_lea.vmem %s6, %s481
      %p483 = pneg %p204
      %p484 = pneg %p201
      %p485 = scmp.lt.s32.totalorder %s30, 1
      %s486 = scalar_select %p485, %s30, 1
      %s487 = scalar_lea.vmem %s7, %s486
      %p488 = pneg %p230
      %p489 = pneg %p227
      %p490 = scmp.lt.s32.totalorder %s30, 1
      %s491 = scalar_select %p490, %s30, 1
      %s492 = smul.addr %s491, 16
      %s493 = smul.addr %s492, 8
      %s494 = scalar_lea.vmem %s8, %s493
      %p495 = pneg %p256
      %p496 = pneg %p253
      %p497 = scmp.lt.s32.totalorder %s30, 1
      %s498 = scalar_select %p497, %s30, 1
      %s499 = smul.addr %s498, 8
      %s500 = scalar_lea.vmem %s9, %s499
      %p501 = pneg %p282
      %p502 = pneg %p279
      %p503 = pneg %p303
      %p504 = pneg %p300
      %p505 = pneg %p324
      %p506 = pneg %p321
      %p507 = pneg %p350
      %p508 = pneg %p347
      %p509 = scmp.lt.s32.totalorder %s29, 0
      %s510 = scalar_select %p509, %s29, 0
      %s511 = smul.addr %s510, 2
      %s512 = scalar_lea.vmem %s12, %s511
      %s513 = smul.u32 2, %s29
      %p514 = scmp.lt.s32.totalorder %s513, 1
      %s515 = scalar_select %p514, %s513, 1
      %s516 = smul.addr %s515, 8
      %s517 = scalar_lea.vmem %s0, %s516
      %s518 = smul.u32 2, %s29
      %p519 = scmp.lt.s32.totalorder %s30, 1
      %s520 = scalar_select %p519, %s30, 1
      %s521 = smul.addr %s520, 4
      %s522 = smul.addr %s521, 8
      %s523 = scalar_lea.vmem %s3, %s522
      %p524 = scmp.lt.s32.totalorder %s30, 1
      %s525 = scalar_select %p524, %s30, 1
      %s526 = scalar_lea.vmem %s4, %s525
      %p527 = scmp.lt.s32.totalorder %s30, 1
      %s528 = scalar_select %p527, %s30, 1
      %s529 = smul.addr %s528, 4
      %s530 = smul.addr %s529, 8
      %s531 = scalar_lea.vmem %s5, %s530
      %p532 = scmp.lt.s32.totalorder %s30, 1
      %s533 = scalar_select %p532, %s30, 1
      %s534 = smul.addr %s533, 4
      %s535 = smul.addr %s534, 8
      %s536 = scalar_lea.vmem %s6, %s535
      %p537 = scmp.lt.s32.totalorder %s30, 1
      %s538 = scalar_select %p537, %s30, 1
      %s539 = scalar_lea.vmem %s7, %s538
      %p540 = scmp.lt.s32.totalorder %s30, 1
      %s541 = scalar_select %p540, %s30, 1
      %s542 = smul.addr %s541, 16
      %s543 = smul.addr %s542, 8
      %s544 = scalar_lea.vmem %s8, %s543
      %p545 = scmp.lt.s32.totalorder %s30, 1
      %s546 = scalar_select %p545, %s30, 1
      %s547 = smul.addr %s546, 8
      %s548 = scalar_lea.vmem %s9, %s547
      %p549 = scmp.lt.s32.totalorder %s29, 0
      %s550 = scalar_select %p549, %s29, 0
      %s551 = smul.addr %s550, 2
      %s552 = scalar_lea.vmem %s12, %s551
      %p553 = scmp.eq.s32.totalorder %s30, 0
      // Predicated region
      $region69: #{tpu_custom_call.1} parent=67 // pred_check
        %p554 = pneg %p553
      $region70: #{tpu_custom_call.1} parent=67 // pred_check_branch
        %556 = sbr.rel (%p554) target = $region72
      $region71: #{tpu_custom_call.1} parent=67 // pred_region
        %v557 = vld [vmem:[%s517] sm:$0xff]
        %v558 = vld [vmem:[%s517 + $0x8] sm:$0xff]
        %v559 = vld [vmem:[%s1] sm:$0xf]
        %vm560 = vcmask 31744
        %v562 = vsel %vm560, %v557, 0
        %v565 = vsel %vm560, %v558, 0
        %vm567 = vcmask 1043456
        %v569 = vsel %vm567, %v559, 0
        %571 = vmatpush.msra.mxu0 0.0
        %572 = vmatpush.msra.mxu0 0.0
        %573 = vmatpush.msra.mxu0 0.0
        %574 = vmatpush.msra.mxu0 0.0
        %575 = vmatpush.msra.mxu0 0.0
        %576 = vmatpush.msra.mxu0 0.0
        %577 = vmatpush.msra.mxu0 0.0
        %578 = vmatpush.msra.mxu0 0.0
        %579 = vmatpush.msra.mxu0 0.0
        %580 = vmatpush.msra.mxu0 0.0
        %581 = vmatpush.msra.mxu0 0.0
        %582 = vmatpush.msra.mxu0 0.0
        %583 = vmatpush.msra.mxu0 0.0
        %584 = vmatpush.msra.mxu0 0.0
        %585 = vmatpush.msra.mxu0 0.0
        %586 = vmatpush.msra.mxu0 %v569
        %587 = vmatmul.f32.gmra.mxu0 %v562
        %v588 = vpop.f32.mrf.mxu0
        %v589 = vadd.f32 0.0, %v588
        %590 = vmatmul.f32.gmra.mxu0 %v565
        %v591 = vpop.f32.mrf.mxu0
        %v592 = vadd.f32 0.0, %v591
        %593 = vdwg.mxu0
        %v594 = vld [vmem:[%s2] sm:$0xff]
        %v595 = vadd.f32 %v589, %v594
        %v596 = vadd.f32 %v592, %v594
        %vm597 = vcmask 261120
        %598 = vst.msk [vmem:[#allocation2] sm:$0xff] %vm597, %v595
        %599 = vst.msk [vmem:[#allocation2 + $0x8] sm:$0xff] %vm597, %v596
      $region72: #{tpu_custom_call.1} parent=67 // pred_fallthru
        _
      %v600 = vld [vmem:[#allocation2] sm:$0xff]
      %v601 = vld [vmem:[#allocation2 + $0x8] sm:$0xff]
      %v602 = vld [vmem:[%s548] sm:$0x3f]
      %v603 = vld [vmem:[%s523] sm:$0xff]
      %v604 = vld [vmem:[%s523 + $0x8] sm:$0xff]
      %v605 = vld [vmem:[%s523 + $0x10] sm:$0xff]
      %v606 = vld [vmem:[%s523 + $0x18] sm:$0xff]
      %v607 = vld [vmem:[%s526] sm:$0x1]
      %v609 = vperm.slane %v607, 0
      %vm611 = vcmask 261120
      %v613 = vsel %vm611, %v600, 0
      %v616 = vsel %vm611, %v601, 0
      %618 = vmatpush.msra.mxu0 0.0
      %619 = vmatpush.msra.mxu0 0.0
      %620 = vmatpush.msra.mxu0 0.0
      %621 = vmatpush.msra.mxu0 0.0
      %622 = vmatpush.msra.mxu0 0.0
      %623 = vmatpush.msra.mxu0 0.0
      %624 = vmatpush.msra.mxu0 0.0
      %625 = vmatpush.msra.mxu0 0.0
      %626 = vmatpush.msra.mxu0 0.0
      %627 = vmatpush.msra.mxu0 0.0
      %628 = vmatpush.msra.mxu0 0.0
      %629 = vmatpush.msra.mxu0 0.0
      %630 = vmatpush.msra.mxu0 %v606
      %631 = vmatpush.msra.mxu0 %v605
      %632 = vmatpush.msra.mxu0 %v604
      %633 = vmatpush.msra.mxu0 %v603
      %634 = vmatmul.f32.gmra.mxu0 %v613
      %v635 = vpop.f32.mrf.mxu0
      %v636 = vadd.f32 %v609, %v635
      %637 = vmatmul.f32.gmra.mxu0 %v616
      %v638 = vpop.f32.mrf.mxu0
      %v639 = vadd.f32 %v609, %v638
      %640 = vdwg.mxu0
      %642 = vrot.lane.b32.xlu0 %v636, 96
      %v643 = vpop.permute.xlu0 %642
      %vm644 = vcmask 64512
      %v645 = vsel %vm644, %v636, 0
      %v647 = vsel %vm644, %v643, 0
      %649 = vmatpush.xpose.msra.mxu0 0.0
      %650 = vmatpush.xpose.msra.mxu0 0.0
      %651 = vmatpush.xpose.msra.mxu0 0.0
      %652 = vmatpush.xpose.msra.mxu0 0.0
      %653 = vmatpush.xpose.msra.mxu0 0.0
      %654 = vmatpush.xpose.msra.mxu0 0.0
      %655 = vmatpush.xpose.msra.mxu0 0.0
      %656 = vmatpush.xpose.msra.mxu0 0.0
      %657 = vmatpush.xpose.msra.mxu0 0.0
      %658 = vmatpush.xpose.msra.mxu0 0.0
      %659 = vmatpush.xpose.msra.mxu0 0.0
      %660 = vmatpush.xpose.msra.mxu0 0.0
      %661 = vmatpush.xpose.msra.mxu0 0.0
      %662 = vmatpush.xpose.msra.mxu0 0.0
      %663 = vmatpush.xpose.msra.mxu0 0.0
      %664 = vmatpush.xpose.msra.mxu0 %v647
      %665 = vmatmul.f32.gmra.mxu0 %v645
      %v666 = vpop.f32.mrf.mxu0
      %v667 = vadd.f32 0.0, %v666
      %668 = vdwg.mxu0
      %670 = vrot.lane.b32.xlu0 %v639, 96
      %v671 = vpop.permute.xlu0 %670
      %v672 = vsel %vm644, %v639, 0
      %v674 = vsel %vm644, %v671, 0
      %676 = vmatpush.xpose.msra.mxu0 0.0
      %677 = vmatpush.xpose.msra.mxu0 0.0
      %678 = vmatpush.xpose.msra.mxu0 0.0
      %679 = vmatpush.xpose.msra.mxu0 0.0
      %680 = vmatpush.xpose.msra.mxu0 0.0
      %681 = vmatpush.xpose.msra.mxu0 0.0
      %682 = vmatpush.xpose.msra.mxu0 0.0
      %683 = vmatpush.xpose.msra.mxu0 0.0
      %684 = vmatpush.xpose.msra.mxu0 0.0
      %685 = vmatpush.xpose.msra.mxu0 0.0
      %686 = vmatpush.xpose.msra.mxu0 0.0
      %687 = vmatpush.xpose.msra.mxu0 0.0
      %688 = vmatpush.xpose.msra.mxu0 0.0
      %689 = vmatpush.xpose.msra.mxu0 0.0
      %690 = vmatpush.xpose.msra.mxu0 0.0
      %691 = vmatpush.xpose.msra.mxu0 %v674
      %692 = vmatmul.f32.gmra.mxu0 %v672
      %v693 = vpop.f32.mrf.mxu0
      %v694 = vadd.f32 0.0, %v693
      %695 = vdwg.mxu0
      %v696 = vsel %vm644, %v667, -inf
      %697 = vmax.xlane.f32.xlu0 %v696
      %v698 = vpop.xlane.xlu0 %697
      %v699 = vsel %vm644, %v694, -inf
      %700 = vmax.xlane.f32.xlu0 %v699
      %v701 = vpop.xlane.xlu0 %700
      %v702 = vsub.f32 %v667, %v698
      %v703 = vsub.f32 %v694, %v701
      %v704 = vmul.f32 %v702, 1.442695
      %v705 = vpow.pop %v704
      %v706 = vmul.f32 %v703, 1.442695
      %v707 = vpow.pop %v706
      %v708 = vsel %vm644, %v705, 0.0
      %709 = vadd.xlane.f32.xlu0 %v708
      %v710 = vpop.xlane.xlu0 %709
      %v711 = vsel %vm644, %v707, 0.0
      %712 = vadd.xlane.f32.xlu0 %v711
      %v713 = vpop.xlane.xlu0 %712
      %v714 = vrcp.pop %v710
      %v715 = vrcp.pop %v713
      %v716 = vmul.f32 %v705, %v714
      %v717 = vmul.f32 %v707, %v715
      %718 = vrot.lane.b32.xlu0 %v636, 64
      %v719 = vpop.permute.xlu0 %718
      %v722 = vsel %vm644, %v716, 0
      %724 = vmatpush.msra.mxu0 0.0
      %725 = vmatpush.msra.mxu0 0.0
      %726 = vmatpush.msra.mxu0 0.0
      %727 = vmatpush.msra.mxu0 0.0
      %728 = vmatpush.msra.mxu0 0.0
      %729 = vmatpush.msra.mxu0 0.0
      %730 = vmatpush.msra.mxu0 0.0
      %731 = vmatpush.msra.mxu0 0.0
      %732 = vmatpush.msra.mxu0 0.0
      %733 = vmatpush.msra.mxu0 0.0
      %734 = vmatpush.msra.mxu0 0.0
      %735 = vmatpush.msra.mxu0 0.0
      %736 = vmatpush.msra.mxu0 0.0
      %737 = vmatpush.msra.mxu0 0.0
      %738 = vmatpush.msra.mxu0 0.0
      %739 = vmatpush.msra.mxu0 %v719
      %740 = vmatmul.f32.gmra.mxu0 %v722
      %v741 = vpop.f32.mrf.mxu0
      %v742 = vadd.f32 0.0, %v741
      %743 = vdwg.mxu0
      %744 = vrot.lane.b32.xlu0 %v639, 64
      %v745 = vpop.permute.xlu0 %744
      %v748 = vsel %vm644, %v717, 0
      %750 = vmatpush.msra.mxu0 0.0
      %751 = vmatpush.msra.mxu0 0.0
      %752 = vmatpush.msra.mxu0 0.0
      %753 = vmatpush.msra.mxu0 0.0
      %754 = vmatpush.msra.mxu0 0.0
      %755 = vmatpush.msra.mxu0 0.0
      %756 = vmatpush.msra.mxu0 0.0
      %757 = vmatpush.msra.mxu0 0.0
      %758 = vmatpush.msra.mxu0 0.0
      %759 = vmatpush.msra.mxu0 0.0
      %760 = vmatpush.msra.mxu0 0.0
      %761 = vmatpush.msra.mxu0 0.0
      %762 = vmatpush.msra.mxu0 0.0
      %763 = vmatpush.msra.mxu0 0.0
      %764 = vmatpush.msra.mxu0 0.0
      %765 = vmatpush.msra.mxu0 %v745
      %766 = vmatmul.f32.gmra.mxu0 %v748
      %v767 = vpop.f32.mrf.mxu0
      %v768 = vadd.f32 0.0, %v767
      %769 = vdwg.mxu0
      %v770 = vld [vmem:[%s531] sm:$0xff]
      %771 = vrot.lane.b32.xlu0 %v636, 120
      %v772 = vpop.permute.xlu0 %771
      %773 = vrot.lane.b32.xlu0 %v636, 88
      %v774 = vpop.permute.xlu0 %773
      %v775 = vsel %vm644, %v772, 0
      %v777 = vsel %vm644, %v774, 0
      %779 = vmatpush.xpose.msra.mxu0 0.0
      %780 = vmatpush.xpose.msra.mxu0 0.0
      %781 = vmatpush.xpose.msra.mxu0 0.0
      %782 = vmatpush.xpose.msra.mxu0 0.0
      %783 = vmatpush.xpose.msra.mxu0 0.0
      %784 = vmatpush.xpose.msra.mxu0 0.0
      %785 = vmatpush.xpose.msra.mxu0 0.0
      %786 = vmatpush.xpose.msra.mxu0 0.0
      %787 = vmatpush.xpose.msra.mxu0 0.0
      %788 = vmatpush.xpose.msra.mxu0 0.0
      %789 = vmatpush.xpose.msra.mxu0 0.0
      %790 = vmatpush.xpose.msra.mxu0 0.0
      %791 = vmatpush.xpose.msra.mxu0 0.0
      %792 = vmatpush.xpose.msra.mxu0 0.0
      %793 = vmatpush.xpose.msra.mxu0 0.0
      %794 = vmatpush.xpose.msra.mxu0 %v777
      %795 = vmatmul.f32.gmra.mxu0 %v775
      %v796 = vpop.f32.mrf.mxu0
      %v797 = vadd.f32 0.0, %v796
      %798 = vdwg.mxu0
      %799 = vrot.lane.b32.xlu0 %v639, 120
      %v800 = vpop.permute.xlu0 %799
      %801 = vrot.lane.b32.xlu0 %v639, 88
      %v802 = vpop.permute.xlu0 %801
      %v803 = vsel %vm644, %v800, 0
      %v805 = vsel %vm644, %v802, 0
      %807 = vmatpush.xpose.msra.mxu0 0.0
      %808 = vmatpush.xpose.msra.mxu0 0.0
      %809 = vmatpush.xpose.msra.mxu0 0.0
      %810 = vmatpush.xpose.msra.mxu0 0.0
      %811 = vmatpush.xpose.msra.mxu0 0.0
      %812 = vmatpush.xpose.msra.mxu0 0.0
      %813 = vmatpush.xpose.msra.mxu0 0.0
      %814 = vmatpush.xpose.msra.mxu0 0.0
      %815 = vmatpush.xpose.msra.mxu0 0.0
      %816 = vmatpush.xpose.msra.mxu0 0.0
      %817 = vmatpush.xpose.msra.mxu0 0.0
      %818 = vmatpush.xpose.msra.mxu0 0.0
      %819 = vmatpush.xpose.msra.mxu0 0.0
      %820 = vmatpush.xpose.msra.mxu0 0.0
      %821 = vmatpush.xpose.msra.mxu0 0.0
      %822 = vmatpush.xpose.msra.mxu0 %v805
      %823 = vmatmul.f32.gmra.mxu0 %v803
      %v824 = vpop.f32.mrf.mxu0
      %v825 = vadd.f32 0.0, %v824
      %826 = vdwg.mxu0
      %v827 = vsel %vm644, %v797, -inf
      %828 = vmax.xlane.f32.xlu0 %v827
      %v829 = vpop.xlane.xlu0 %828
      %v830 = vsel %vm644, %v825, -inf
      %831 = vmax.xlane.f32.xlu0 %v830
      %v832 = vpop.xlane.xlu0 %831
      %v833 = vsub.f32 %v797, %v829
      %v834 = vsub.f32 %v825, %v832
      %v835 = vmul.f32 %v833, 1.442695
      %v836 = vpow.pop %v835
      %v837 = vmul.f32 %v834, 1.442695
      %v838 = vpow.pop %v837
      %v839 = vsel %vm644, %v836, 0.0
      %840 = vadd.xlane.f32.xlu0 %v839
      %v841 = vpop.xlane.xlu0 %840
      %v842 = vsel %vm644, %v838, 0.0
      %843 = vadd.xlane.f32.xlu0 %v842
      %v844 = vpop.xlane.xlu0 %843
      %v845 = vrcp.pop %v841
      %v846 = vrcp.pop %v844
      %v847 = vmul.f32 %v836, %v845
      %v848 = vmul.f32 %v838, %v846
      %849 = vrot.lane.b32.xlu0 %v636, 56
      %v850 = vpop.permute.xlu0 %849
      %v853 = vsel %vm644, %v847, 0
      %855 = vmatpush.msra.mxu0 0.0
      %856 = vmatpush.msra.mxu0 0.0
      %857 = vmatpush.msra.mxu0 0.0
      %858 = vmatpush.msra.mxu0 0.0
      %859 = vmatpush.msra.mxu0 0.0
      %860 = vmatpush.msra.mxu0 0.0
      %861 = vmatpush.msra.mxu0 0.0
      %862 = vmatpush.msra.mxu0 0.0
      %863 = vmatpush.msra.mxu0 0.0
      %864 = vmatpush.msra.mxu0 0.0
      %865 = vmatpush.msra.mxu0 0.0
      %866 = vmatpush.msra.mxu0 0.0
      %867 = vmatpush.msra.mxu0 0.0
      %868 = vmatpush.msra.mxu0 0.0
      %869 = vmatpush.msra.mxu0 0.0
      %870 = vmatpush.msra.mxu0 %v850
      %871 = vmatmul.f32.gmra.mxu0 %v853
      %v872 = vpop.f32.mrf.mxu0
      %v873 = vadd.f32 0.0, %v872
      %874 = vdwg.mxu0
      %875 = vrot.lane.b32.xlu0 %v639, 56
      %v876 = vpop.permute.xlu0 %875
      %v879 = vsel %vm644, %v848, 0
      %881 = vmatpush.msra.mxu0 0.0
      %882 = vmatpush.msra.mxu0 0.0
      %883 = vmatpush.msra.mxu0 0.0
      %884 = vmatpush.msra.mxu0 0.0
      %885 = vmatpush.msra.mxu0 0.0
      %886 = vmatpush.msra.mxu0 0.0
      %887 = vmatpush.msra.mxu0 0.0
      %888 = vmatpush.msra.mxu0 0.0
      %889 = vmatpush.msra.mxu0 0.0
      %890 = vmatpush.msra.mxu0 0.0
      %891 = vmatpush.msra.mxu0 0.0
      %892 = vmatpush.msra.mxu0 0.0
      %893 = vmatpush.msra.mxu0 0.0
      %894 = vmatpush.msra.mxu0 0.0
      %895 = vmatpush.msra.mxu0 0.0
      %896 = vmatpush.msra.mxu0 %v876
      %897 = vmatmul.f32.gmra.mxu0 %v879
      %v898 = vpop.f32.mrf.mxu0
      %v899 = vadd.f32 0.0, %v898
      %900 = vdwg.mxu0
      %v901 = vld [vmem:[%s531 + $0x8] sm:$0xff]
      %v903 = vsel %vm644, %v873, 0
      %v906 = vsel %vm644, %v899, 0
      %908 = vmatpush.msra.mxu0 0.0
      %909 = vmatpush.msra.mxu0 0.0
      %910 = vmatpush.msra.mxu0 0.0
      %911 = vmatpush.msra.mxu0 0.0
      %912 = vmatpush.msra.mxu0 0.0
      %913 = vmatpush.msra.mxu0 0.0
      %914 = vmatpush.msra.mxu0 0.0
      %915 = vmatpush.msra.mxu0 0.0
      %916 = vmatpush.msra.mxu0 0.0
      %917 = vmatpush.msra.mxu0 0.0
      %918 = vmatpush.msra.mxu0 0.0
      %919 = vmatpush.msra.mxu0 0.0
      %920 = vmatpush.msra.mxu0 0.0
      %921 = vmatpush.msra.mxu0 0.0
      %922 = vmatpush.msra.mxu0 0.0
      %923 = vmatpush.msra.mxu0 %v901
      %924 = vmatmul.f32.gmra.mxu0 %v903
      %v925 = vpop.f32.mrf.mxu0
      %v926 = vadd.f32 0.0, %v925
      %927 = vmatmul.f32.gmra.mxu0 %v906
      %v928 = vpop.f32.mrf.mxu0
      %v929 = vadd.f32 0.0, %v928
      %930 = vdwg.mxu0
      %v932 = vsel %vm644, %v742, 0
      %v935 = vsel %vm644, %v768, 0
      %937 = vmatpush.msra.mxu0 0.0
      %938 = vmatpush.msra.mxu0 0.0
      %939 = vmatpush.msra.mxu0 0.0
      %940 = vmatpush.msra.mxu0 0.0
      %941 = vmatpush.msra.mxu0 0.0
      %942 = vmatpush.msra.mxu0 0.0
      %943 = vmatpush.msra.mxu0 0.0
      %944 = vmatpush.msra.mxu0 0.0
      %945 = vmatpush.msra.mxu0 0.0
      %946 = vmatpush.msra.mxu0 0.0
      %947 = vmatpush.msra.mxu0 0.0
      %948 = vmatpush.msra.mxu0 0.0
      %949 = vmatpush.msra.mxu0 0.0
      %950 = vmatpush.msra.mxu0 0.0
      %951 = vmatpush.msra.mxu0 0.0
      %952 = vmatpush.msra.mxu0 %v770
      %953 = vmatmul.f32.gmra.mxu0 %v932
      %v954 = vpop.f32.mrf.mxu0
      %v955 = vadd.f32 %v926, %v954
      %956 = vmatmul.f32.gmra.mxu0 %v935
      %v957 = vpop.f32.mrf.mxu0
      %v958 = vadd.f32 %v929, %v957
      %959 = vdwg.mxu0
      %960 = vrot.lane.b32.xlu0 %v636, 112
      %v961 = vpop.permute.xlu0 %960
      %962 = vrot.lane.b32.xlu0 %v636, 80
      %v963 = vpop.permute.xlu0 %962
      %v964 = vsel %vm644, %v961, 0
      %v966 = vsel %vm644, %v963, 0
      %968 = vmatpush.xpose.msra.mxu0 0.0
      %969 = vmatpush.xpose.msra.mxu0 0.0
      %970 = vmatpush.xpose.msra.mxu0 0.0
      %971 = vmatpush.xpose.msra.mxu0 0.0
      %972 = vmatpush.xpose.msra.mxu0 0.0
      %973 = vmatpush.xpose.msra.mxu0 0.0
      %974 = vmatpush.xpose.msra.mxu0 0.0
      %975 = vmatpush.xpose.msra.mxu0 0.0
      %976 = vmatpush.xpose.msra.mxu0 0.0
      %977 = vmatpush.xpose.msra.mxu0 0.0
      %978 = vmatpush.xpose.msra.mxu0 0.0
      %979 = vmatpush.xpose.msra.mxu0 0.0
      %980 = vmatpush.xpose.msra.mxu0 0.0
      %981 = vmatpush.xpose.msra.mxu0 0.0
      %982 = vmatpush.xpose.msra.mxu0 0.0
      %983 = vmatpush.xpose.msra.mxu0 %v966
      %984 = vmatmul.f32.gmra.mxu0 %v964
      %v985 = vpop.f32.mrf.mxu0
      %v986 = vadd.f32 0.0, %v985
      %987 = vdwg.mxu0
      %988 = vrot.lane.b32.xlu0 %v639, 112
      %v989 = vpop.permute.xlu0 %988
      %990 = vrot.lane.b32.xlu0 %v639, 80
      %v991 = vpop.permute.xlu0 %990
      %v992 = vsel %vm644, %v989, 0
      %v994 = vsel %vm644, %v991, 0
      %996 = vmatpush.xpose.msra.mxu0 0.0
      %997 = vmatpush.xpose.msra.mxu0 0.0
      %998 = vmatpush.xpose.msra.mxu0 0.0
      %999 = vmatpush.xpose.msra.mxu0 0.0
      %1000 = vmatpush.xpose.msra.mxu0 0.0
      %1001 = vmatpush.xpose.msra.mxu0 0.0
      %1002 = vmatpush.xpose.msra.mxu0 0.0
      %1003 = vmatpush.xpose.msra.mxu0 0.0
      %1004 = vmatpush.xpose.msra.mxu0 0.0
      %1005 = vmatpush.xpose.msra.mxu0 0.0
      %1006 = vmatpush.xpose.msra.mxu0 0.0
      %1007 = vmatpush.xpose.msra.mxu0 0.0
      %1008 = vmatpush.xpose.msra.mxu0 0.0
      %1009 = vmatpush.xpose.msra.mxu0 0.0
      %1010 = vmatpush.xpose.msra.mxu0 0.0
      %1011 = vmatpush.xpose.msra.mxu0 %v994
      %1012 = vmatmul.f32.gmra.mxu0 %v992
      %v1013 = vpop.f32.mrf.mxu0
      %v1014 = vadd.f32 0.0, %v1013
      %1015 = vdwg.mxu0
      %v1016 = vsel %vm644, %v986, -inf
      %1017 = vmax.xlane.f32.xlu0 %v1016
      %v1018 = vpop.xlane.xlu0 %1017
      %v1019 = vsel %vm644, %v1014, -inf
      %1020 = vmax.xlane.f32.xlu0 %v1019
      %v1021 = vpop.xlane.xlu0 %1020
      %v1022 = vsub.f32 %v986, %v1018
      %v1023 = vsub.f32 %v1014, %v1021
      %v1024 = vmul.f32 %v1022, 1.442695
      %v1025 = vpow.pop %v1024
      %v1026 = vmul.f32 %v1023, 1.442695
      %v1027 = vpow.pop %v1026
      %v1028 = vsel %vm644, %v1025, 0.0
      %1029 = vadd.xlane.f32.xlu0 %v1028
      %v1030 = vpop.xlane.xlu0 %1029
      %v1031 = vsel %vm644, %v1027, 0.0
      %1032 = vadd.xlane.f32.xlu0 %v1031
      %v1033 = vpop.xlane.xlu0 %1032
      %v1034 = vrcp.pop %v1030
      %v1035 = vrcp.pop %v1033
      %v1036 = vmul.f32 %v1025, %v1034
      %v1037 = vmul.f32 %v1027, %v1035
      %1038 = vrot.lane.b32.xlu0 %v636, 48
      %v1039 = vpop.permute.xlu0 %1038
      %v1042 = vsel %vm644, %v1036, 0
      %1044 = vmatpush.msra.mxu0 0.0
      %1045 = vmatpush.msra.mxu0 0.0
      %1046 = vmatpush.msra.mxu0 0.0
      %1047 = vmatpush.msra.mxu0 0.0
      %1048 = vmatpush.msra.mxu0 0.0
      %1049 = vmatpush.msra.mxu0 0.0
      %1050 = vmatpush.msra.mxu0 0.0
      %1051 = vmatpush.msra.mxu0 0.0
      %1052 = vmatpush.msra.mxu0 0.0
      %1053 = vmatpush.msra.mxu0 0.0
      %1054 = vmatpush.msra.mxu0 0.0
      %1055 = vmatpush.msra.mxu0 0.0
      %1056 = vmatpush.msra.mxu0 0.0
      %1057 = vmatpush.msra.mxu0 0.0
      %1058 = vmatpush.msra.mxu0 0.0
      %1059 = vmatpush.msra.mxu0 %v1039
      %1060 = vmatmul.f32.gmra.mxu0 %v1042
      %v1061 = vpop.f32.mrf.mxu0
      %v1062 = vadd.f32 0.0, %v1061
      %1063 = vdwg.mxu0
      %1064 = vrot.lane.b32.xlu0 %v639, 48
      %v1065 = vpop.permute.xlu0 %1064
      %v1068 = vsel %vm644, %v1037, 0
      %1070 = vmatpush.msra.mxu0 0.0
      %1071 = vmatpush.msra.mxu0 0.0
      %1072 = vmatpush.msra.mxu0 0.0
      %1073 = vmatpush.msra.mxu0 0.0
      %1074 = vmatpush.msra.mxu0 0.0
      %1075 = vmatpush.msra.mxu0 0.0
      %1076 = vmatpush.msra.mxu0 0.0
      %1077 = vmatpush.msra.mxu0 0.0
      %1078 = vmatpush.msra.mxu0 0.0
      %1079 = vmatpush.msra.mxu0 0.0
      %1080 = vmatpush.msra.mxu0 0.0
      %1081 = vmatpush.msra.mxu0 0.0
      %1082 = vmatpush.msra.mxu0 0.0
      %1083 = vmatpush.msra.mxu0 0.0
      %1084 = vmatpush.msra.mxu0 0.0
      %1085 = vmatpush.msra.mxu0 %v1065
      %1086 = vmatmul.f32.gmra.mxu0 %v1068
      %v1087 = vpop.f32.mrf.mxu0
      %v1088 = vadd.f32 0.0, %v1087
      %1089 = vdwg.mxu0
      %v1090 = vld [vmem:[%s531 + $0x10] sm:$0xff]
      %v1092 = vsel %vm644, %v1062, 0
      %v1095 = vsel %vm644, %v1088, 0
      %1097 = vmatpush.msra.mxu0 0.0
      %1098 = vmatpush.msra.mxu0 0.0
      %1099 = vmatpush.msra.mxu0 0.0
      %1100 = vmatpush.msra.mxu0 0.0
      %1101 = vmatpush.msra.mxu0 0.0
      %1102 = vmatpush.msra.mxu0 0.0
      %1103 = vmatpush.msra.mxu0 0.0
      %1104 = vmatpush.msra.mxu0 0.0
      %1105 = vmatpush.msra.mxu0 0.0
      %1106 = vmatpush.msra.mxu0 0.0
      %1107 = vmatpush.msra.mxu0 0.0
      %1108 = vmatpush.msra.mxu0 0.0
      %1109 = vmatpush.msra.mxu0 0.0
      %1110 = vmatpush.msra.mxu0 0.0
      %1111 = vmatpush.msra.mxu0 0.0
      %1112 = vmatpush.msra.mxu0 %v1090
      %1113 = vmatmul.f32.gmra.mxu0 %v1092
      %v1114 = vpop.f32.mrf.mxu0
      %v1115 = vadd.f32 0.0, %v1114
      %1116 = vmatmul.f32.gmra.mxu0 %v1095
      %v1117 = vpop.f32.mrf.mxu0
      %v1118 = vadd.f32 0.0, %v1117
      %1119 = vdwg.mxu0
      %v1120 = vadd.f32 %v955, %v1115
      %v1121 = vadd.f32 %v958, %v1118
      %1122 = vrot.lane.b32.xlu0 %v636, 104
      %v1123 = vpop.permute.xlu0 %1122
      %1124 = vrot.lane.b32.xlu0 %v636, 72
      %v1125 = vpop.permute.xlu0 %1124
      %v1126 = vsel %vm644, %v1123, 0
      %v1128 = vsel %vm644, %v1125, 0
      %1130 = vmatpush.xpose.msra.mxu0 0.0
      %1131 = vmatpush.xpose.msra.mxu0 0.0
      %1132 = vmatpush.xpose.msra.mxu0 0.0
      %1133 = vmatpush.xpose.msra.mxu0 0.0
      %1134 = vmatpush.xpose.msra.mxu0 0.0
      %1135 = vmatpush.xpose.msra.mxu0 0.0
      %1136 = vmatpush.xpose.msra.mxu0 0.0
      %1137 = vmatpush.xpose.msra.mxu0 0.0
      %1138 = vmatpush.xpose.msra.mxu0 0.0
      %1139 = vmatpush.xpose.msra.mxu0 0.0
      %1140 = vmatpush.xpose.msra.mxu0 0.0
      %1141 = vmatpush.xpose.msra.mxu0 0.0
      %1142 = vmatpush.xpose.msra.mxu0 0.0
      %1143 = vmatpush.xpose.msra.mxu0 0.0
      %1144 = vmatpush.xpose.msra.mxu0 0.0
      %1145 = vmatpush.xpose.msra.mxu0 %v1128
      %1146 = vmatmul.f32.gmra.mxu0 %v1126
      %v1147 = vpop.f32.mrf.mxu0
      %v1148 = vadd.f32 0.0, %v1147
      %1149 = vdwg.mxu0
      %1150 = vrot.lane.b32.xlu0 %v639, 104
      %v1151 = vpop.permute.xlu0 %1150
      %1152 = vrot.lane.b32.xlu0 %v639, 72
      %v1153 = vpop.permute.xlu0 %1152
      %v1154 = vsel %vm644, %v1151, 0
      %v1156 = vsel %vm644, %v1153, 0
      %1158 = vmatpush.xpose.msra.mxu0 0.0
      %1159 = vmatpush.xpose.msra.mxu0 0.0
      %1160 = vmatpush.xpose.msra.mxu0 0.0
      %1161 = vmatpush.xpose.msra.mxu0 0.0
      %1162 = vmatpush.xpose.msra.mxu0 0.0
      %1163 = vmatpush.xpose.msra.mxu0 0.0
      %1164 = vmatpush.xpose.msra.mxu0 0.0
      %1165 = vmatpush.xpose.msra.mxu0 0.0
      %1166 = vmatpush.xpose.msra.mxu0 0.0
      %1167 = vmatpush.xpose.msra.mxu0 0.0
      %1168 = vmatpush.xpose.msra.mxu0 0.0
      %1169 = vmatpush.xpose.msra.mxu0 0.0
      %1170 = vmatpush.xpose.msra.mxu0 0.0
      %1171 = vmatpush.xpose.msra.mxu0 0.0
      %1172 = vmatpush.xpose.msra.mxu0 0.0
      %1173 = vmatpush.xpose.msra.mxu0 %v1156
      %1174 = vmatmul.f32.gmra.mxu0 %v1154
      %v1175 = vpop.f32.mrf.mxu0
      %v1176 = vadd.f32 0.0, %v1175
      %1177 = vdwg.mxu0
      %v1178 = vsel %vm644, %v1148, -inf
      %1179 = vmax.xlane.f32.xlu0 %v1178
      %v1180 = vpop.xlane.xlu0 %1179
      %v1181 = vsel %vm644, %v1176, -inf
      %1182 = vmax.xlane.f32.xlu0 %v1181
      %v1183 = vpop.xlane.xlu0 %1182
      %v1184 = vsub.f32 %v1148, %v1180
      %v1185 = vsub.f32 %v1176, %v1183
      %v1186 = vmul.f32 %v1184, 1.442695
      %v1187 = vpow.pop %v1186
      %v1188 = vmul.f32 %v1185, 1.442695
      %v1189 = vpow.pop %v1188
      %v1190 = vsel %vm644, %v1187, 0.0
      %1191 = vadd.xlane.f32.xlu0 %v1190
      %v1192 = vpop.xlane.xlu0 %1191
      %v1193 = vsel %vm644, %v1189, 0.0
      %1194 = vadd.xlane.f32.xlu0 %v1193
      %v1195 = vpop.xlane.xlu0 %1194
      %v1196 = vrcp.pop %v1192
      %v1197 = vrcp.pop %v1195
      %v1198 = vmul.f32 %v1187, %v1196
      %v1199 = vmul.f32 %v1189, %v1197
      %1200 = vrot.lane.b32.xlu0 %v636, 40
      %v1201 = vpop.permute.xlu0 %1200
      %v1204 = vsel %vm644, %v1198, 0
      %1206 = vmatpush.msra.mxu0 0.0
      %1207 = vmatpush.msra.mxu0 0.0
      %1208 = vmatpush.msra.mxu0 0.0
      %1209 = vmatpush.msra.mxu0 0.0
      %1210 = vmatpush.msra.mxu0 0.0
      %1211 = vmatpush.msra.mxu0 0.0
      %1212 = vmatpush.msra.mxu0 0.0
      %1213 = vmatpush.msra.mxu0 0.0
      %1214 = vmatpush.msra.mxu0 0.0
      %1215 = vmatpush.msra.mxu0 0.0
      %1216 = vmatpush.msra.mxu0 0.0
      %1217 = vmatpush.msra.mxu0 0.0
      %1218 = vmatpush.msra.mxu0 0.0
      %1219 = vmatpush.msra.mxu0 0.0
      %1220 = vmatpush.msra.mxu0 0.0
      %1221 = vmatpush.msra.mxu0 %v1201
      %1222 = vmatmul.f32.gmra.mxu0 %v1204
      %v1223 = vpop.f32.mrf.mxu0
      %v1224 = vadd.f32 0.0, %v1223
      %1225 = vdwg.mxu0
      %1226 = vrot.lane.b32.xlu0 %v639, 40
      %v1227 = vpop.permute.xlu0 %1226
      %v1230 = vsel %vm644, %v1199, 0
      %1232 = vmatpush.msra.mxu0 0.0
      %1233 = vmatpush.msra.mxu0 0.0
      %1234 = vmatpush.msra.mxu0 0.0
      %1235 = vmatpush.msra.mxu0 0.0
      %1236 = vmatpush.msra.mxu0 0.0
      %1237 = vmatpush.msra.mxu0 0.0
      %1238 = vmatpush.msra.mxu0 0.0
      %1239 = vmatpush.msra.mxu0 0.0
      %1240 = vmatpush.msra.mxu0 0.0
      %1241 = vmatpush.msra.mxu0 0.0
      %1242 = vmatpush.msra.mxu0 0.0
      %1243 = vmatpush.msra.mxu0 0.0
      %1244 = vmatpush.msra.mxu0 0.0
      %1245 = vmatpush.msra.mxu0 0.0
      %1246 = vmatpush.msra.mxu0 0.0
      %1247 = vmatpush.msra.mxu0 %v1227
      %1248 = vmatmul.f32.gmra.mxu0 %v1230
      %v1249 = vpop.f32.mrf.mxu0
      %v1250 = vadd.f32 0.0, %v1249
      %1251 = vdwg.mxu0
      %v1252 = vld [vmem:[%s531 + $0x18] sm:$0xff]
      %v1254 = vsel %vm644, %v1224, 0
      %v1257 = vsel %vm644, %v1250, 0
      %1259 = vmatpush.msra.mxu0 0.0
      %1260 = vmatpush.msra.mxu0 0.0
      %1261 = vmatpush.msra.mxu0 0.0
      %1262 = vmatpush.msra.mxu0 0.0
      %1263 = vmatpush.msra.mxu0 0.0
      %1264 = vmatpush.msra.mxu0 0.0
      %1265 = vmatpush.msra.mxu0 0.0
      %1266 = vmatpush.msra.mxu0 0.0
      %1267 = vmatpush.msra.mxu0 0.0
      %1268 = vmatpush.msra.mxu0 0.0
      %1269 = vmatpush.msra.mxu0 0.0
      %1270 = vmatpush.msra.mxu0 0.0
      %1271 = vmatpush.msra.mxu0 0.0
      %1272 = vmatpush.msra.mxu0 0.0
      %1273 = vmatpush.msra.mxu0 0.0
      %1274 = vmatpush.msra.mxu0 %v1252
      %1275 = vmatmul.f32.gmra.mxu0 %v1254
      %v1276 = vpop.f32.mrf.mxu0
      %v1277 = vadd.f32 0.0, %v1276
      %1278 = vmatmul.f32.gmra.mxu0 %v1257
      %v1279 = vpop.f32.mrf.mxu0
      %v1280 = vadd.f32 0.0, %v1279
      %1281 = vdwg.mxu0
      %v1282 = vadd.f32 %v1120, %v1277
      %v1283 = vadd.f32 %v1121, %v1280
      %v1284 = vadd.f32 %v600, %v1282
      %v1285 = vadd.f32 %v601, %v1283
      %v1286 = vperm.slane %v602, 0
      %v1287 = vadd.f32 %v1284, %v1286
      %v1288 = vadd.f32 %v1285, %v1286
      %v1289 = vsel %vm611, %v1287, 0.0
      %1290 = vadd.xlane.f32.xlu0 %v1289
      %v1291 = vpop.xlane.xlu0 %1290
      %v1292 = vsel %vm611, %v1288, 0.0
      %1293 = vadd.xlane.f32.xlu0 %v1292
      %v1294 = vpop.xlane.xlu0 %1293
      %v1295 = vrcp.pop 32.0
      %v1296 = vmul.f32 32.0, %v1295
      %v1297 = vsub.f32 1.0, %v1296
      %v1298 = vmul.f32 %v1295, %v1297
      %v1299 = vadd.f32 %v1295, %v1298
      %vm1300 = vweird.f32 %v1295
      %v1301 = vsel %vm1300, %v1295, %v1299
      %v1302 = vmul.f32 %v1291, %v1301
      %v1303 = vmul.f32 %v1294, %v1301
      %v1304 = vsub.f32 %v1287, %v1302
      %v1305 = vsub.f32 %v1288, %v1303
      %v1306 = vmul.f32 %v1304, %v1304
      %v1307 = vmul.f32 %v1305, %v1305
      %v1308 = vsel %vm611, %v1306, 0.0
      %1309 = vadd.xlane.f32.xlu0 %v1308
      %v1310 = vpop.xlane.xlu0 %1309
      %v1311 = vsel %vm611, %v1307, 0.0
      %1312 = vadd.xlane.f32.xlu0 %v1311
      %v1313 = vpop.xlane.xlu0 %1312
      %v1314 = vmul.f32 %v1310, %v1301
      %v1315 = vmul.f32 %v1313, %v1301
      %v1316 = vadd.f32 %v1314, 1e-05
      %v1317 = vadd.f32 %v1315, 1e-05
      %v1318 = vrsqrt.pop %v1316
      %v1319 = vmul.f32 %v1318, %v1316
      %v1320 = vmul.f32 %v1319, %v1318
      %v1321 = vmul.f32 0.5, %v1320
      %v1322 = vsub.f32 1.5, %v1321
      %v1323 = vmul.f32 %v1318, %v1322
      %vm1324 = vweird.f32 %v1316
      %vm1325 = vweird.f32 %v1318
      %vm1326 = vmor %vm1324, %vm1325
      %v1327 = vsel %vm1326, %v1318, %v1323
      %v1328 = vrsqrt.pop %v1317
      %v1329 = vmul.f32 %v1328, %v1317
      %v1330 = vmul.f32 %v1329, %v1328
      %v1331 = vmul.f32 0.5, %v1330
      %v1332 = vsub.f32 1.5, %v1331
      %v1333 = vmul.f32 %v1328, %v1332
      %vm1334 = vweird.f32 %v1317
      %vm1335 = vweird.f32 %v1328
      %vm1336 = vmor %vm1334, %vm1335
      %v1337 = vsel %vm1336, %v1328, %v1333
      %v1338 = vmul.f32 %v1304, %v1327
      %v1339 = vmul.f32 %v1305, %v1337
      %v1340 = vperm.slane %v602, 1
      %v1341 = vmul.f32 %v1338, %v1340
      %v1342 = vmul.f32 %v1339, %v1340
      %v1343 = vperm.slane %v602, 2
      %v1344 = vadd.f32 %v1341, %v1343
      %v1345 = vadd.f32 %v1342, %v1343
      %v1346 = vld [vmem:[%s536] sm:$0xff]
      %v1347 = vld [vmem:[%s536 + $0x8] sm:$0xff]
      %v1348 = vld [vmem:[%s536 + $0x10] sm:$0xff]
      %v1349 = vld [vmem:[%s536 + $0x18] sm:$0xff]
      %v1350 = vld [vmem:[%s539] sm:$0x1]
      %v1352 = vperm.slane %v1350, 0
      %v1355 = vsel %vm611, %v1344, 0
      %v1358 = vsel %vm611, %v1345, 0
      %1360 = vmatpush.msra.mxu0 0.0
      %1361 = vmatpush.msra.mxu0 0.0
      %1362 = vmatpush.msra.mxu0 0.0
      %1363 = vmatpush.msra.mxu0 0.0
      %1364 = vmatpush.msra.mxu0 0.0
      %1365 = vmatpush.msra.mxu0 0.0
      %1366 = vmatpush.msra.mxu0 0.0
      %1367 = vmatpush.msra.mxu0 0.0
      %1368 = vmatpush.msra.mxu0 0.0
      %1369 = vmatpush.msra.mxu0 0.0
      %1370 = vmatpush.msra.mxu0 0.0
      %1371 = vmatpush.msra.mxu0 0.0
      %1372 = vmatpush.msra.mxu0 %v1349
      %1373 = vmatpush.msra.mxu0 %v1348
      %1374 = vmatpush.msra.mxu0 %v1347
      %1375 = vmatpush.msra.mxu0 %v1346
      %1376 = vmatmul.f32.gmra.mxu0 %v1355
      %v1377 = vpop.f32.mrf.mxu0
      %v1378 = vadd.f32 %v1352, %v1377
      %1379 = vmatmul.f32.gmra.mxu0 %v1358
      %v1380 = vpop.f32.mrf.mxu0
      %v1381 = vadd.f32 %v1352, %v1380
      %1382 = vdwg.mxu0
      %v1383 = vmul.f32 %v1378, 0.5
      %v1384 = vmul.f32 %v1381, 0.5
      %v1385 = vmul.f32 %v1378, 0.70710677
      %v1386 = vmul.f32 %v1381, 0.70710677
      %v1387 = vand.u32 2147483647, %v1385
      %v1388 = vand.u32 2147483647, %v1386
      %v1389 = vmul.f32 %v1387, 0.3275911
      %v1390 = vmul.f32 %v1388, 0.3275911
      %v1391 = vadd.f32 %v1389, 1.0
      %v1392 = vadd.f32 %v1390, 1.0
      %v1393 = vrcp.pop %v1391
      %v1394 = vmul.f32 %v1391, %v1393
      %v1395 = vsub.f32 1.0, %v1394
      %v1396 = vmul.f32 %v1393, %v1395
      %v1397 = vadd.f32 %v1393, %v1396
      %vm1398 = vweird.f32 %v1391
      %vm1399 = vweird.f32 %v1393
      %vm1400 = vmor %vm1398, %vm1399
      %v1401 = vsel %vm1400, %v1393, %v1397
      %v1402 = vand.u32 2147483647, %v1391
      %vm1403 = vcmp.eq.f32.partialorder %v1402, 8.507059e+37
      %v1404 = vand.u32 %v1391, 2147483648
      %v1405 = vor.u32 1.1754944e-38, %v1404
      %v1406 = vsel %vm1403, %v1405, %v1401
      %v1407 = vmul.f32 1.0, %v1406
      %v1408 = vrcp.pop %v1392
      %v1409 = vmul.f32 %v1392, %v1408
      %v1410 = vsub.f32 1.0, %v1409
      %v1411 = vmul.f32 %v1408, %v1410
      %v1412 = vadd.f32 %v1408, %v1411
      %vm1413 = vweird.f32 %v1392
      %vm1414 = vweird.f32 %v1408
      %vm1415 = vmor %vm1413, %vm1414
      %v1416 = vsel %vm1415, %v1408, %v1412
      %v1417 = vand.u32 2147483647, %v1392
      %vm1418 = vcmp.eq.f32.partialorder %v1417, 8.507059e+37
      %v1419 = vand.u32 %v1392, 2147483648
      %v1420 = vor.u32 1.1754944e-38, %v1419
      %v1421 = vsel %vm1418, %v1420, %v1416
      %v1422 = vmul.f32 1.0, %v1421
      %v1423 = vmul.f32 %v1407, 1.0614054
      %v1424 = vmul.f32 %v1422, 1.0614054
      %v1425 = vadd.f32 %v1423, -1.4531521
      %v1426 = vadd.f32 %v1424, -1.4531521
      %v1427 = vmul.f32 %v1425, %v1407
      %v1428 = vmul.f32 %v1426, %v1422
      %v1429 = vadd.f32 %v1427, 1.4214138
      %v1430 = vadd.f32 %v1428, 1.4214138
      %v1431 = vmul.f32 %v1429, %v1407
      %v1432 = vmul.f32 %v1430, %v1422
      %v1433 = vadd.f32 %v1431, -0.28449672
      %v1434 = vadd.f32 %v1432, -0.28449672
      %v1435 = vmul.f32 %v1433, %v1407
      %v1436 = vmul.f32 %v1434, %v1422
      %v1437 = vadd.f32 %v1435, 0.2548296
      %v1438 = vadd.f32 %v1436, 0.2548296
      %v1439 = vmul.f32 %v1437, %v1407
      %v1440 = vmul.f32 %v1438, %v1422
      %v1441 = vsub.f32 0.0, %v1387
      %v1442 = vsub.f32 0.0, %v1388
      %v1443 = vmul.f32 %v1441, %v1387
      %v1444 = vmul.f32 %v1442, %v1388
      %v1445 = vmul.f32 %v1443, 1.442695
      %v1446 = vpow.pop %v1445
      %v1447 = vmul.f32 %v1444, 1.442695
      %v1448 = vpow.pop %v1447
      %v1449 = vmul.f32 %v1439, %v1446
      %v1450 = vmul.f32 %v1440, %v1448
      %v1451 = vsub.f32 1.0, %v1449
      %v1452 = vsub.f32 1.0, %v1450
      %vm1453 = vcmp.ge.f32.partialorder %v1385, 0.0
      %vm1454 = vcmp.ge.f32.partialorder %v1386, 0.0
      %v1455 = vsub.f32 0.0, %v1451
      %v1456 = vsub.f32 0.0, %v1452
      %v1457 = vsel %vm1453, %v1451, %v1455
      %v1458 = vsel %vm1454, %v1452, %v1456
      %v1459 = vadd.f32 %v1457, 1.0
      %v1460 = vadd.f32 %v1458, 1.0
      %v1461 = vmul.f32 %v1383, %v1459
      %v1462 = vmul.f32 %v1384, %v1460
      %v1463 = vld [vmem:[%s544] sm:$0xff]
      %v1464 = vld [vmem:[%s544 + $0x8] sm:$0xff]
      %v1465 = vld [vmem:[%s544 + $0x10] sm:$0xff]
      %v1466 = vld [vmem:[%s544 + $0x18] sm:$0xff]
      %v1467 = vld [vmem:[%s544 + $0x20] sm:$0xff]
      %v1468 = vld [vmem:[%s544 + $0x28] sm:$0xff]
      %v1469 = vld [vmem:[%s544 + $0x30] sm:$0xff]
      %v1470 = vld [vmem:[%s544 + $0x38] sm:$0xff]
      %v1471 = vld [vmem:[%s544 + $0x40] sm:$0xff]
      %v1472 = vld [vmem:[%s544 + $0x48] sm:$0xff]
      %v1473 = vld [vmem:[%s544 + $0x50] sm:$0xff]
      %v1474 = vld [vmem:[%s544 + $0x58] sm:$0xff]
      %v1475 = vld [vmem:[%s544 + $0x60] sm:$0xff]
      %v1476 = vld [vmem:[%s544 + $0x68] sm:$0xff]
      %v1477 = vld [vmem:[%s544 + $0x70] sm:$0xff]
      %v1478 = vld [vmem:[%s544 + $0x78] sm:$0xff]
      %v1479 = vperm.slane %v602, 3
      %1480 = vmatpush.msra.mxu0 %v1478
      %1481 = vmatpush.msra.mxu0 %v1477
      %1482 = vmatpush.msra.mxu0 %v1476
      %1483 = vmatpush.msra.mxu0 %v1475
      %1484 = vmatpush.msra.mxu0 %v1474
      %1485 = vmatpush.msra.mxu0 %v1473
      %1486 = vmatpush.msra.mxu0 %v1472
      %1487 = vmatpush.msra.mxu0 %v1471
      %1488 = vmatpush.msra.mxu0 %v1470
      %1489 = vmatpush.msra.mxu0 %v1469
      %1490 = vmatpush.msra.mxu0 %v1468
      %1491 = vmatpush.msra.mxu0 %v1467
      %1492 = vmatpush.msra.mxu0 %v1466
      %1493 = vmatpush.msra.mxu0 %v1465
      %1494 = vmatpush.msra.mxu0 %v1464
      %1495 = vmatpush.msra.mxu0 %v1463
      %1496 = vmatmul.f32.gmra.mxu0 %v1461
      %v1497 = vpop.f32.mrf.mxu0
      %v1498 = vadd.f32 %v1479, %v1497
      %1499 = vmatmul.f32.gmra.mxu0 %v1462
      %v1500 = vpop.f32.mrf.mxu0
      %v1501 = vadd.f32 %v1479, %v1500
      %1502 = vdwg.mxu0
      %v1503 = vadd.f32 %v1344, %v1498
      %v1504 = vadd.f32 %v1345, %v1501
      %v1505 = vsel %vm611, %v1503, 0.0
      %1506 = vadd.xlane.f32.xlu0 %v1505
      %v1507 = vpop.xlane.xlu0 %1506
      %v1508 = vsel %vm611, %v1504, 0.0
      %1509 = vadd.xlane.f32.xlu0 %v1508
      %v1510 = vpop.xlane.xlu0 %1509
      %v1511 = vmul.f32 %v1507, %v1301
      %v1512 = vmul.f32 %v1510, %v1301
      %v1513 = vsub.f32 %v1503, %v1511
      %v1514 = vsub.f32 %v1504, %v1512
      %v1515 = vmul.f32 %v1513, %v1513
      %v1516 = vmul.f32 %v1514, %v1514
      %v1517 = vsel %vm611, %v1515, 0.0
      %1518 = vadd.xlane.f32.xlu0 %v1517
      %v1519 = vpop.xlane.xlu0 %1518
      %v1520 = vsel %vm611, %v1516, 0.0
      %1521 = vadd.xlane.f32.xlu0 %v1520
      %v1522 = vpop.xlane.xlu0 %1521
      %v1523 = vmul.f32 %v1519, %v1301
      %v1524 = vmul.f32 %v1522, %v1301
      %v1525 = vadd.f32 %v1523, 1e-05
      %v1526 = vadd.f32 %v1524, 1e-05
      %v1527 = vrsqrt.pop %v1525
      %v1528 = vmul.f32 %v1527, %v1525
      %v1529 = vmul.f32 %v1528, %v1527
      %v1530 = vmul.f32 0.5, %v1529
      %v1531 = vsub.f32 1.5, %v1530
      %v1532 = vmul.f32 %v1527, %v1531
      %vm1533 = vweird.f32 %v1525
      %vm1534 = vweird.f32 %v1527
      %vm1535 = vmor %vm1533, %vm1534
      %v1536 = vsel %vm1535, %v1527, %v1532
      %v1537 = vrsqrt.pop %v1526
      %v1538 = vmul.f32 %v1537, %v1526
      %v1539 = vmul.f32 %v1538, %v1537
      %v1540 = vmul.f32 0.5, %v1539
      %v1541 = vsub.f32 1.5, %v1540
      %v1542 = vmul.f32 %v1537, %v1541
      %vm1543 = vweird.f32 %v1526
      %vm1544 = vweird.f32 %v1537
      %vm1545 = vmor %vm1543, %vm1544
      %v1546 = vsel %vm1545, %v1537, %v1542
      %v1547 = vmul.f32 %v1513, %v1536
      %v1548 = vmul.f32 %v1514, %v1546
      %v1549 = vperm.slane %v602, 4
      %v1550 = vmul.f32 %v1547, %v1549
      %v1551 = vmul.f32 %v1548, %v1549
      %v1552 = vperm.slane %v602, 5
      %v1553 = vadd.f32 %v1550, %v1552
      %v1554 = vadd.f32 %v1551, %v1552
      %1555 = vst.msk [vmem:[#allocation2] sm:$0xff] %vm611, %v1553
      %1556 = vst.msk [vmem:[#allocation2 + $0x8] sm:$0xff] %vm611, %v1554
      %p1557 = scmp.eq.s32.totalorder %s30, 1
      // Predicated region
      $region73: #{tpu_custom_call.1} parent=67 // pred_check
        %p1558 = pneg %p1557
      $region74: #{tpu_custom_call.1} parent=67 // pred_check_branch
        %1560 = sbr.rel (%p1558) target = $region76
      $region75: #{tpu_custom_call.1} parent=67 // pred_region
        %v1561 = vsel %vm611, %v1553, 0.0
        %v1562 = vrot.slane %v1561, 4
        %v1563 = vadd.f32 %v1561, %v1562
        %v1564 = vrot.slane %v1563, 2
        %v1565 = vadd.f32 %v1563, %v1564
        %v1566 = vrot.slane %v1565, 1
        %v1567 = vadd.f32 %v1565, %v1566
        %v1568 = vsel %vm611, %v1554, 0.0
        %v1569 = vrot.slane %v1568, 4
        %v1570 = vadd.f32 %v1568, %v1569
        %v1571 = vrot.slane %v1570, 2
        %v1572 = vadd.f32 %v1570, %v1571
        %v1573 = vrot.slane %v1572, 1
        %v1574 = vadd.f32 %v1572, %v1573
        %v1575 = vrcp.pop 8.0
        %v1576 = vmul.f32 8.0, %v1575
        %v1577 = vsub.f32 1.0, %v1576
        %v1578 = vmul.f32 %v1575, %v1577
        %v1579 = vadd.f32 %v1575, %v1578
        %vm1580 = vweird.f32 %v1575
        %v1581 = vsel %vm1580, %v1575, %v1579
        %v1582 = vmul.f32 %v1567, %v1581
        %v1583 = vmul.f32 %v1574, %v1581
        %v1584 = vld [vmem:[%s10] sm:$0xff]
        %v1585 = vld [vmem:[%s10 + $0x8] sm:$0xff]
        %v1586 = vld [vmem:[%s10 + $0x10] sm:$0xff]
        %v1587 = vld [vmem:[%s10 + $0x18] sm:$0xff]
        %v1588 = vld [vmem:[#allocation3] sm:$0x1]
        %v1590 = vperm.slane %v1588, 0
        %vm1594 = vcmask 1041409
        %v1595 = vsel %vm1594, %v1583, %v1582
        %v1596 = vsel %vm611, %v1595, 0
        %1598 = vmatpush.msra.mxu0 0.0
        %1599 = vmatpush.msra.mxu0 0.0
        %1600 = vmatpush.msra.mxu0 0.0
        %1601 = vmatpush.msra.mxu0 0.0
        %1602 = vmatpush.msra.mxu0 0.0
        %1603 = vmatpush.msra.mxu0 0.0
        %1604 = vmatpush.msra.mxu0 0.0
        %1605 = vmatpush.msra.mxu0 0.0
        %1606 = vmatpush.msra.mxu0 0.0
        %1607 = vmatpush.msra.mxu0 0.0
        %1608 = vmatpush.msra.mxu0 0.0
        %1609 = vmatpush.msra.mxu0 0.0
        %1610 = vmatpush.msra.mxu0 %v1587
        %1611 = vmatpush.msra.mxu0 %v1586
        %1612 = vmatpush.msra.mxu0 %v1585
        %1613 = vmatpush.msra.mxu0 %v1584
        %1614 = vmatmul.f32.gmra.mxu0 %v1596
        %v1615 = vpop.f32.mrf.mxu0
        %v1616 = vadd.f32 %v1590, %v1615
        %1617 = vdwg.mxu0
        %vm1618 = vcmask 1024
        %1619 = vst.msk [vmem:[%s552] sm:$0x3] %vm1618, %v1616
      $region76: #{tpu_custom_call.1} parent=67 // pred_fallthru
        _
      %p1620 = scmp.lt.s32.totalorder %s29, 0
      %s1621 = scalar_select %p1620, %s29, 0
      %s1622 = smul.addr %s1621, 2
      %s1623 = scalar_lea.vmem %s12, %s1622
      // Predicated region
      $region77: #{tpu_custom_call.1} parent=67 // pred_check
        %p1624 = pneg %p347
      $region78: #{tpu_custom_call.1} parent=67 // pred_check_branch
        %1626 = sbr.rel (%p1624) target = $region80
      $region79: #{tpu_custom_call.1} parent=67 // pred_region
        _
      $region80: #{tpu_custom_call.1} parent=67 // pred_fallthru
        _
      // Predicated region
      $region81: #{tpu_custom_call.1} parent=67 // pred_check
        %p1627 = pneg %p347
      $region82: #{tpu_custom_call.1} parent=67 // pred_check_branch
        %1629 = sbr.rel (%p1627) target = $region84
      $region83: #{tpu_custom_call.1} parent=67 // pred_region
        %p1630 = scmp.lt.s32.totalorder %s29, 0
        %s1631 = scalar_select %p1630, %s29, 0
        %s1632 = smul.addr %s1631, 2
        %s1633 = scalar_lea.vmem %s12, %s1632
      $region84: #{tpu_custom_call.1} parent=67 // pred_fallthru
        _
    $region68: #{tpu_custom_call.1} parent=5 // pred_fallthru
      _
    %p1634 = scmp.le.s32.totalorder 2, %s20
    // Predicated region
    $region85: #{tpu_custom_call.1} parent=5 // pred_check
      %p1635 = pneg %p1634
    $region86: #{tpu_custom_call.1} parent=5 // pred_check_branch
      %1637 = sbr.rel (%p1635) target = $region88
    $region87: #{tpu_custom_call.1} parent=5 // pred_region
      %s1638 = ssub.s32 %s20, 2
    $region88: #{tpu_custom_call.1} parent=5 // pred_fallthru
      _
  $region6: #{tpu_custom_call.1} parent=0 // loop_footer
    %s24 = sadd.s32 1, %s20
  $region7: #{tpu_custom_call.1} parent=0 // loop_footer_branch
    %19 = sbr.rel target = $region3
  $region8: #{tpu_custom_call.1} parent=0 // loop_exit
    _

</llo_original>
